<compile_context>
chip_gen: v5e
topology: v5e:2x2
jax: 0.10.0
libtpu: 0.0.40
codegen_flags: <defaults>
</compile_context>

<pallas_src>
import jax
import jax.numpy as jnp
from jax.experimental import pallas as pl
from jax.experimental.pallas import tpu as pltpu


def _round_up(x: int, m: int) -> int:
    return ((x + m - 1) // m) * m


def _cdiv(a: int, b: int) -> int:
    return -(-a // b)


# -----------------------------------------------------------------------------
# Kernel: GAP (sum; 1/HW folded into w1) -> Linear+BN(folded) -> ReLU -> Linear
# -----------------------------------------------------------------------------
def head_kernel(feat_ref, w1_ref, b1_ref, w2_ref, b2_ref, out_ref):
    # feat_ref: (TM, HW, Cp) — channels lane-dense, spatial on sublanes.
    # Global-average-pool as a cross-sublane SUM; the 1/HW scale is pre-folded
    # into w1 on the host, so no per-tile VPU multiply is needed here.
    pooled = jnp.sum(feat_ref[...].astype(jnp.float32), axis=1)          # (TM, Cp)

    # Linear(n_features, 512) with eval-mode BatchNorm1d folded into (w1', b1').
    h = jnp.dot(pooled.astype(jnp.bfloat16), w1_ref[...],
                preferred_element_type=jnp.float32) + b1_ref[...]        # (TM, H)

    # ReLU (Dropout in eval mode == identity).
    h = jnp.maximum(h, 0.0)

    # Linear(512, num_classes_padded) — lane-dense (k_pad % 128 == 0) store.
    out_ref[...] = jnp.dot(h.astype(jnp.bfloat16), w2_ref[...],
                           preferred_element_type=jnp.float32) + b2_ref[...]


# -----------------------------------------------------------------------------
# Host-side helpers
# -----------------------------------------------------------------------------
def _vmem_cap_bytes() -> int:
    """Per-generation scoped-VMEM ceiling.

    ~96 MiB on 128-MiB chips (v5e/v6e); 48 MiB on v7x (64 MiB physical) or when
    the hardware query is unavailable (conservative default is safe everywhere).
    """
    try:
        phys = int(getattr(pltpu.get_tpu_info(), "vmem_capacity_bytes", 0))
    except Exception:
        phys = 0
    if phys >= (128 << 20):
        return 96 << 20
    return 48 << 20


def prepare_head_params(params, hw, *, eps=1e-5):
    """One-time folding/packing of head params (hoist out of the per-call path).

    Folds eval-mode BatchNorm1d and the 1/HW global-average-pool scale into the
    first Linear, casts MXU operands to bf16, and zero-pads channels / classes
    to 128-lane multiples for lane-dense DMAs and unmasked stores.
    """
    c, hidden = params["w1"].shape
    num_classes = params["w2"].shape[1]
    c_pad = _round_up(max(c, 1), 128)
    k_pad = _round_up(max(num_classes, 1), 128)

    scale = params["gamma"] / jnp.sqrt(params["running_var"] + eps)      # (hidden,)
    shift = params["beta"] - params["running_mean"] * scale              # (hidden,)

    # BN scale and 1/HW pool normalization folded into w1.
    w1f = params["w1"] * (scale[None, :] / float(hw))                    # (c, hidden)
    w1p = jnp.zeros((c_pad, hidden), jnp.bfloat16)
    w1p = w1p.at[:c, :].set(w1f.astype(jnp.bfloat16))
    b1f = (params["b1"] * scale + shift).reshape(1, hidden).astype(jnp.float32)

    w2p = jnp.zeros((hidden, k_pad), jnp.bfloat16)
    w2p = w2p.at[:, :num_classes].set(params["w2"].astype(jnp.bfloat16))
    b2p = jnp.zeros((1, k_pad), jnp.float32)
    b2p = b2p.at[:, :num_classes].set(params["b2"].astype(jnp.float32))

    return {"w1": w1p, "b1": b1f, "w2": w2p, "b2": b2p,
            "c": int(c), "hw": int(hw), "num_classes": int(num_classes)}


def _choose_tm(n, feat_row_bytes, out_row_bytes, weight_bytes, vmem_cap):
    """Derive the batch-tile size from the VMEM budget (not a fixed constant)."""
    margin = 2 << 20
    avail = max(vmem_cap - 2 * weight_bytes - margin, 1 << 20)
    per_row = 2 * (feat_row_bytes + out_row_bytes)        # double-buffered tiles
    tm_vmem = max(8, avail // per_row)
    # ~8 MiB feat tile already saturates HBM and amortizes ~0.35 us/step overhead.
    tm_target = max(8, (8 << 20) // max(feat_row_bytes, 1))
    tm = int(min(tm_vmem, tm_target))
    # Keep >= 2 batch tiles so the "parallel" grid axis feeds both v7x TCs
    # (harmless on single-TC v5e/v6e).
    if n >= 16:
        tm = min(tm, _round_up(_cdiv(n, 2), 8))
    tm = max(8, (tm // 8) * 8)
    # Balance tiles so we never drag along a near-empty padded trailing tile.
    num_tiles = max(1, _cdiv(n, tm))
    tm = _round_up(_cdiv(n, num_tiles), 8)
    return tm, num_tiles * tm, num_tiles


def containers_head(feat, head, *, data_format="NHWC"):
    """Fused classifier head applied to a backbone feature map.

    feat: (N, H, W, C) channels-last (TPU-native fast path, no transpose) or
          (N, C, H, W) with data_format="NCHW" (PyTorch layout; pays one extra
          full-feature-map transpose pass in HBM).
    head: output of prepare_head_params (call once, reuse across steps).
    """
    if data_format == "NCHW":
        # TODO(synk): prefer channels-last features from the backbone; this
        # transpose re-streams the entire (dominant) feature map through HBM.
        feat = jnp.transpose(feat, (0, 2, 3, 1))
    n, h, w, c = feat.shape
    hw = h * w
    if hw != head["hw"] or c != head["c"]:
        raise ValueError("feature-map shape does not match prepared head params")

    w1p, b1p, w2p, b2p = head["w1"], head["b1"], head["w2"], head["b2"]
    c_pad, hidden = w1p.shape
    k_pad = w2p.shape[1]
    num_classes = head["num_classes"]

    feat = feat.reshape(n, hw, c)
    if c_pad != c:
        # Only for non-standard widths; real EfficientNet widths (1280/1536/1792)
        # are already 128-multiples and skip this pad pass.
        feat = jnp.pad(feat, ((0, 0), (0, 0), (0, c_pad - c)))

    feat_itemsize = jnp.dtype(feat.dtype).itemsize          # f32 or bf16 accepted
    feat_row_bytes = hw * c_pad * feat_itemsize
    out_row_bytes = k_pad * 4
    weight_bytes = w1p.size * 2 + w2p.size * 2 + b1p.size * 4 + b2p.size * 4

    vmem_cap = _vmem_cap_bytes()
    tm, n_pad, num_tiles = _choose_tm(n, feat_row_bytes, out_row_bytes,
                                      weight_bytes, vmem_cap)
    if n_pad != n:
        feat = jnp.pad(feat, ((0, n_pad - n), (0, 0), (0, 0)))

    vmem_need = 2 * weight_bytes + 2 * tm * (feat_row_bytes + out_row_bytes)
    vmem_limit = max(16 << 20, min(int(vmem_need * 1.25) + (2 << 20), vmem_cap))

    cost = pl.CostEstimate(
        flops=2 * n_pad * c_pad * hidden + 2 * n_pad * hidden * k_pad
              + n_pad * hw * c_pad,
        transcendentals=0,
        bytes_accessed=n_pad * feat_row_bytes + weight_bytes + n_pad * out_row_bytes,
    )

    def build(single_buffer_weights):
        # Constant-index weight blocks don't need double buffering; reclaiming
        # the second copy gives VMEM headroom for a larger feat tile.
        wmode = {"pipeline_mode": pl.Buffered(1)} if single_buffer_weights else {}
        return pl.pallas_call(
            head_kernel,
            out_shape=jax.ShapeDtypeStruct((n_pad, k_pad), jnp.float32),
            grid=(num_tiles,),
            in_specs=[
                pl.BlockSpec((tm, hw, c_pad), lambda i: (i, 0, 0)),        # batch-tiled
                pl.BlockSpec((c_pad, hidden), lambda i: (0, 0), **wmode),  # resident
                pl.BlockSpec((1, hidden), lambda i: (0, 0), **wmode),      # resident
                pl.BlockSpec((hidden, k_pad), lambda i: (0, 0), **wmode),  # resident
                pl.BlockSpec((1, k_pad), lambda i: (0, 0), **wmode),       # resident
            ],
            out_specs=pl.BlockSpec((tm, k_pad), lambda i: (i, 0)),
            compiler_params=pltpu.CompilerParams(
                dimension_semantics=("parallel",),
                vmem_limit_bytes=vmem_limit,
            ),
            cost_estimate=cost,
        )

    try:
        out = build(True)(feat, w1p, b1p, w2p, b2p)
    except Exception:
        # Fallback if this jax build rejects pipeline_mode/Buffered on the
        # top-level TPU pipeline (only costs the extra weight buffers).
        out = build(False)(feat, w1p, b1p, w2p, b2p)

    return out[:n, :num_classes]


# -----------------------------------------------------------------------------
# Params + pure-JAX reference (eval-mode head semantics of ContainersModel)
# -----------------------------------------------------------------------------
def init_params(key, n_features, hidden, num_classes):
    k1, k2, k3, k4, k5, k6 = jax.random.split(key, 6)
    return {
        # Linear(n_features, 512)
        "w1": jax.random.normal(k1, (n_features, hidden), jnp.float32) * 0.02,
        "b1": jax.random.normal(k2, (hidden,), jnp.float32) * 0.01,
        # BatchNorm1d(512) — affine params + running stats (eval mode)
        "gamma": jnp.ones((hidden,), jnp.float32),
        "beta": jnp.zeros((hidden,), jnp.float32),
        "running_mean": jax.random.normal(k3, (hidden,), jnp.float32) * 0.1,
        "running_var": jnp.abs(jax.random.normal(k4, (hidden,), jnp.float32)) + 1.0,
        # Linear(512, num_classes)
        "w2": jax.random.normal(k5, (hidden, num_classes), jnp.float32) * 0.02,
        "b2": jax.random.normal(k6, (num_classes,), jnp.float32) * 0.01,
    }


def reference_head(feat_nhwc, params, *, eps=1e-5):
    """Pure-JAX f32 reference of the same eval-mode head (channels-last input)."""
    pooled = feat_nhwc.astype(jnp.float32).mean(axis=(1, 2))
    h = pooled @ params["w1"] + params["b1"]
    h = (h - params["running_mean"]) / jnp.sqrt(params["running_var"] + eps)
    h = h * params["gamma"] + params["beta"]
    h = jnp.maximum(h, 0.0)
    return h @ params["w2"] + params["b2"]


if __name__ == "__main__":
    key = jax.random.PRNGKey(0)
    kf, kp = jax.random.split(key)

    # Small, module-consistent shapes: batch=8, 4x4 feature map, 128 channels
    # (stand-in for EfficientNet classifier.in_features), hidden=512, 10 classes.
    N, H, W, C = 8, 4, 4, 128
    HIDDEN, NUM_CLASSES = 512, 10

    # Channels-last feature map — what a TPU-native backbone should emit
    # (avoids the NCHW->NHWC transpose pass entirely).
    feat = jax.random.normal(kf, (N, H, W, C), jnp.float32)
    params = init_params(kp, C, HIDDEN, NUM_CLASSES)

    head = prepare_head_params(params, hw=H * W)   # one-time folding/packing
    out = containers_head(feat, head)
    out = jax.block_until_ready(out)

    ref = reference_head(feat, params)
    assert out.shape == (N, NUM_CLASSES)
    # bf16 MXU operands (f32 accumulation) -> loosened tolerance vs f32 reference.
    assert jnp.allclose(out, ref, atol=1e-2, rtol=1e-2), "mismatch vs reference"

    print("KERNEL_OK")
</pallas_src>

<mosaic_0001>
module attributes {stable_mosaic.version = 11 : i64} {
  func.func @head_kernel(%arg0: i32, %arg1: memref<8x16x128xf32, #tpu.memory_space<vmem>>, %arg2: memref<128x512xbf16, #tpu.memory_space<vmem>>, %arg3: memref<1x512xf32, #tpu.memory_space<vmem>>, %arg4: memref<512x128xbf16, #tpu.memory_space<vmem>>, %arg5: memref<1x128xf32, #tpu.memory_space<vmem>>, %arg6: memref<8x128xf32, #tpu.memory_space<vmem>>) attributes {dimension_semantics = [#tpu.dimension_semantics<parallel>], iteration_bounds = array<i64: 1>, scalar_prefetch = 0 : i64, scratch_operands = 0 : i64, tpu.core_type = #tpu.core_type<tc>, window_params = [{transform_indices = @transform_0, window_bounds = array<i64: 8, 16, 128>}, {pipeline_mode = #tpu.pipeline_mode<synchronous>, transform_indices = @transform_1, window_bounds = array<i64: 128, 512>}, {pipeline_mode = #tpu.pipeline_mode<synchronous>, transform_indices = @transform_2, window_bounds = array<i64: 1, 512>}, {pipeline_mode = #tpu.pipeline_mode<synchronous>, transform_indices = @transform_3, window_bounds = array<i64: 512, 128>}, {pipeline_mode = #tpu.pipeline_mode<synchronous>, transform_indices = @transform_4, window_bounds = array<i64: 1, 128>}, {transform_indices = @transform_5, window_bounds = array<i64: 8, 128>}]} {
    %c0 = arith.constant 0 : index
    %c0_0 = arith.constant 0 : index
    %c0_1 = arith.constant 0 : index
    %0 = vector.load %arg1[%c0, %c0_0, %c0_1] : memref<8x16x128xf32, #tpu.memory_space<vmem>>, vector<8x16x128xf32>
    %cst = arith.constant dense<0.000000e+00> : vector<8x128xf32>
    %1 = vector.multi_reduction <add>, %0, %cst [1] : vector<8x16x128xf32> to vector<8x128xf32>
    %2 = arith.truncf %1 : vector<8x128xf32> to vector<8x128xbf16>
    %c0_2 = arith.constant 0 : index
    %c0_3 = arith.constant 0 : index
    %3 = vector.load %arg2[%c0_2, %c0_3] : memref<128x512xbf16, #tpu.memory_space<vmem>>, vector<128x512xbf16>
    %cst_4 = arith.constant dense<0.000000e+00> : vector<8x512xf32>
    %4 = tpu.matmul %2, %3, %cst_4 {dimension_numbers = #tpu.dot_dimension_numbers<[1], [0], [0], [1], [0, 0, 1, 1], [], []>} : vector<8x128xbf16>, vector<128x512xbf16>, vector<8x512xf32> -> vector<8x512xf32>
    %c0_5 = arith.constant 0 : index
    %c0_6 = arith.constant 0 : index
    %5 = vector.load %arg3[%c0_5, %c0_6] : memref<1x512xf32, #tpu.memory_space<vmem>>, vector<1x512xf32>
    %6 = vector.broadcast %5 : vector<1x512xf32> to vector<8x512xf32>
    %7 = arith.addf %4, %6 : vector<8x512xf32>
    %cst_7 = arith.constant 0.000000e+00 : f32
    %8 = vector.broadcast %cst_7 : f32 to vector<8x512xf32>
    %9 = arith.maximumf %7, %8 : vector<8x512xf32>
    %10 = arith.truncf %9 : vector<8x512xf32> to vector<8x512xbf16>
    %c0_8 = arith.constant 0 : index
    %c0_9 = arith.constant 0 : index
    %11 = vector.load %arg4[%c0_8, %c0_9] : memref<512x128xbf16, #tpu.memory_space<vmem>>, vector<512x128xbf16>
    %cst_10 = arith.constant dense<0.000000e+00> : vector<8x128xf32>
    %12 = tpu.matmul %10, %11, %cst_10 {dimension_numbers = #tpu.dot_dimension_numbers<[1], [0], [0], [1], [0, 0, 1, 1], [], []>} : vector<8x512xbf16>, vector<512x128xbf16>, vector<8x128xf32> -> vector<8x128xf32>
    %c0_11 = arith.constant 0 : index
    %c0_12 = arith.constant 0 : index
    %13 = vector.load %arg5[%c0_11, %c0_12] : memref<1x128xf32, #tpu.memory_space<vmem>>, vector<1x128xf32>
    %14 = vector.broadcast %13 : vector<1x128xf32> to vector<8x128xf32>
    %15 = arith.addf %12, %14 : vector<8x128xf32>
    %c0_13 = arith.constant 0 : index
    %c0_14 = arith.constant 0 : index
    %16 = vector.load %arg6[%c0_13, %c0_14] : memref<8x128xf32, #tpu.memory_space<vmem>>, vector<8x128xf32>
    tpu.vector_store %arg6[%c0_13, %c0_14], %15 {strides = array<i32>} : memref<8x128xf32, #tpu.memory_space<vmem>>, vector<8x128xf32>,
    return
  }
  func.func @transform_0(%arg0: i32) -> (i32, i32, i32) {
    %c0_i32 = arith.constant 0 : i32
    %c0_i32_0 = arith.constant 0 : i32
    %c0_i32_1 = arith.constant 0 : i32
    return %arg0, %c0_i32, %c0_i32_0 : i32, i32, i32
  }
  func.func @transform_1(%arg0: i32) -> (i32, i32) {
    %c0_i32 = arith.constant 0 : i32
    %c0_i32_0 = arith.constant 0 : i32
    %c0_i32_1 = arith.constant 0 : i32
    return %c0_i32, %c0_i32_0 : i32, i32
  }
  func.func @transform_2(%arg0: i32) -> (i32, i32) {
    %c0_i32 = arith.constant 0 : i32
    %c0_i32_0 = arith.constant 0 : i32
    %c0_i32_1 = arith.constant 0 : i32
    return %c0_i32, %c0_i32_0 : i32, i32
  }
  func.func @transform_3(%arg0: i32) -> (i32, i32) {
    %c0_i32 = arith.constant 0 : i32
    %c0_i32_0 = arith.constant 0 : i32
    %c0_i32_1 = arith.constant 0 : i32
    return %c0_i32, %c0_i32_0 : i32, i32
  }
  func.func @transform_4(%arg0: i32) -> (i32, i32) {
    %c0_i32 = arith.constant 0 : i32
    %c0_i32_0 = arith.constant 0 : i32
    %c0_i32_1 = arith.constant 0 : i32
    return %c0_i32, %c0_i32_0 : i32, i32
  }
  func.func @transform_5(%arg0: i32) -> (i32, i32) {
    %c0_i32 = arith.constant 0 : i32
    %c0_i32_0 = arith.constant 0 : i32
    return %arg0, %c0_i32 : i32, i32
  }
}

module attributes {stable_mosaic.version = 11 : i64} {
  func.func @head_kernel(%arg0: i32, %arg1: memref<8x16x128xf32, #tpu.memory_space<vmem>>, %arg2: memref<128x512xbf16, #tpu.memory_space<vmem>>, %arg3: memref<1x512xf32, #tpu.memory_space<vmem>>, %arg4: memref<512x128xbf16, #tpu.memory_space<vmem>>, %arg5: memref<1x128xf32, #tpu.memory_space<vmem>>, %arg6: memref<8x128xf32, #tpu.memory_space<vmem>>) attributes {dimension_semantics = [#tpu.dimension_semantics<parallel>], iteration_bounds = array<i64: 1>, scalar_prefetch = 0 : i64, scratch_operands = 0 : i64, tpu.core_type = #tpu.core_type<tc>, window_params = [{transform_indices = @transform_0, window_bounds = array<i64: 8, 16, 128>}, {pipeline_mode = #tpu.pipeline_mode<synchronous>, transform_indices = @transform_1, window_bounds = array<i64: 128, 512>}, {pipeline_mode = #tpu.pipeline_mode<synchronous>, transform_indices = @transform_2, window_bounds = array<i64: 1, 512>}, {pipeline_mode = #tpu.pipeline_mode<synchronous>, transform_indices = @transform_3, window_bounds = array<i64: 512, 128>}, {pipeline_mode = #tpu.pipeline_mode<synchronous>, transform_indices = @transform_4, window_bounds = array<i64: 1, 128>}, {transform_indices = @transform_5, window_bounds = array<i64: 8, 128>}]} {
    %c0 = arith.constant 0 : index
    %c0_0 = arith.constant 0 : index
    %c0_1 = arith.constant 0 : index
    %0 = vector.load %arg1[%c0, %c0_0, %c0_1] : memref<8x16x128xf32, #tpu.memory_space<vmem>>, vector<8x16x128xf32>
    %cst = arith.constant dense<0.000000e+00> : vector<8x128xf32>
    %1 = vector.multi_reduction <add>, %0, %cst [1] : vector<8x16x128xf32> to vector<8x128xf32>
    %2 = arith.truncf %1 : vector<8x128xf32> to vector<8x128xbf16>
    %c0_2 = arith.constant 0 : index
    %c0_3 = arith.constant 0 : index
    %3 = vector.load %arg2[%c0_2, %c0_3] : memref<128x512xbf16, #tpu.memory_space<vmem>>, vector<128x512xbf16>
    %cst_4 = arith.constant dense<0.000000e+00> : vector<8x512xf32>
    %4 = tpu.matmul %2, %3, %cst_4 {dimension_numbers = #tpu.dot_dimension_numbers<[1], [0], [0], [1], [0, 0, 1, 1], [], []>} : vector<8x128xbf16>, vector<128x512xbf16>, vector<8x512xf32> -> vector<8x512xf32>
    %c0_5 = arith.constant 0 : index
    %c0_6 = arith.constant 0 : index
    %5 = vector.load %arg3[%c0_5, %c0_6] : memref<1x512xf32, #tpu.memory_space<vmem>>, vector<1x512xf32>
    %6 = vector.broadcast %5 : vector<1x512xf32> to vector<8x512xf32>
    %7 = arith.addf %4, %6 : vector<8x512xf32>
    %cst_7 = arith.constant 0.000000e+00 : f32
    %8 = vector.broadcast %cst_7 : f32 to vector<8x512xf32>
    %9 = arith.maximumf %7, %8 : vector<8x512xf32>
    %10 = arith.truncf %9 : vector<8x512xf32> to vector<8x512xbf16>
    %c0_8 = arith.constant 0 : index
    %c0_9 = arith.constant 0 : index
    %11 = vector.load %arg4[%c0_8, %c0_9] : memref<512x128xbf16, #tpu.memory_space<vmem>>, vector<512x128xbf16>
    %cst_10 = arith.constant dense<0.000000e+00> : vector<8x128xf32>
    %12 = tpu.matmul %10, %11, %cst_10 {dimension_numbers = #tpu.dot_dimension_numbers<[1], [0], [0], [1], [0, 0, 1, 1], [], []>} : vector<8x512xbf16>, vector<512x128xbf16>, vector<8x128xf32> -> vector<8x128xf32>
    %c0_11 = arith.constant 0 : index
    %c0_12 = arith.constant 0 : index
    %13 = vector.load %arg5[%c0_11, %c0_12] : memref<1x128xf32, #tpu.memory_space<vmem>>, vector<1x128xf32>
    %14 = vector.broadcast %13 : vector<1x128xf32> to vector<8x128xf32>
    %15 = arith.addf %12, %14 : vector<8x128xf32>
    %c0_13 = arith.constant 0 : index
    %c0_14 = arith.constant 0 : index
    %16 = vector.load %arg6[%c0_13, %c0_14] : memref<8x128xf32, #tpu.memory_space<vmem>>, vector<8x128xf32>
    tpu.vector_store %arg6[%c0_13, %c0_14], %15 {strides = array<i32>} : memref<8x128xf32, #tpu.memory_space<vmem>>, vector<8x128xf32>,
    return
  }
  func.func @transform_0(%arg0: i32) -> (i32, i32, i32) {
    %c0_i32 = arith.constant 0 : i32
    %c0_i32_0 = arith.constant 0 : i32
    %c0_i32_1 = arith.constant 0 : i32
    return %arg0, %c0_i32, %c0_i32_0 : i32, i32, i32
  }
  func.func @transform_1(%arg0: i32) -> (i32, i32) {
    %c0_i32 = arith.constant 0 : i32
    %c0_i32_0 = arith.constant 0 : i32
    %c0_i32_1 = arith.constant 0 : i32
    return %c0_i32, %c0_i32_0 : i32, i32
  }
  func.func @transform_2(%arg0: i32) -> (i32, i32) {
    %c0_i32 = arith.constant 0 : i32
    %c0_i32_0 = arith.constant 0 : i32
    %c0_i32_1 = arith.constant 0 : i32
    return %c0_i32, %c0_i32_0 : i32, i32
  }
  func.func @transform_3(%arg0: i32) -> (i32, i32) {
    %c0_i32 = arith.constant 0 : i32
    %c0_i32_0 = arith.constant 0 : i32
    %c0_i32_1 = arith.constant 0 : i32
    return %c0_i32, %c0_i32_0 : i32, i32
  }
  func.func @transform_4(%arg0: i32) -> (i32, i32) {
    %c0_i32 = arith.constant 0 : i32
    %c0_i32_0 = arith.constant 0 : i32
    %c0_i32_1 = arith.constant 0 : i32
    return %c0_i32, %c0_i32_0 : i32, i32
  }
  func.func @transform_5(%arg0: i32) -> (i32, i32) {
    %c0_i32 = arith.constant 0 : i32
    %c0_i32_0 = arith.constant 0 : i32
    return %arg0, %c0_i32 : i32, i32
  }
}

</mosaic_0001>

<llo_original>
// kernel: tpu_custom_call.1
$region0: #{tpu_custom_call.1}
  #allocation0 [shape = 'u32[]', space=smem, size = 0x4, offset = 0x4, fixed_abs, tag = 'smem constant byte address 0x4 - core index']
  #allocation1 [shape = 'u32[72,128]{1,0:T(1,128)}', space=vmem, size = 0x9000, scoped, tag = 'internal scratch']
  %s0 = inlined_call_operand.hbm [shape: f32[8,16,128], index: 0, kind: input, shape index: {}]
  %s1 = inlined_call_operand.hbm [shape: bf16[128,512], index: 1, kind: input, shape index: {}]
  %s2 = inlined_call_operand.hbm [shape: f32[1,512], index: 2, kind: input, shape index: {}]
  %s3 = inlined_call_operand.hbm [shape: bf16[512,128], index: 3, kind: input, shape index: {}]
  %s4 = inlined_call_operand.vmem [shape: f32[1,128], index: 4, kind: input, shape index: {}]
  %s5 = inlined_call_operand.hbm [shape: f32[8,128], index: 5, kind: output, shape index: {}]
  %s6 = sld [smem:[#allocation0]]
  $region46: #{tpu_custom_call.1} parent=0
    _
  %s8 = ssub.s32 1, %s6
  %s9 = scalar_select 0, %s8, %s6
  $region1: #{tpu_custom_call.1} parent=0
    #allocation2 [shape = 'u8[65536]{0}', space=vmem, size = 0x10000, scoped, tag = 'input window, operand 0, single buffered']
    #allocation3 [shape = 's32[1]{0}', space=sflag, size = 0x4, scoped, tag = 'scoped memory for tpu_custom_call.1']
    #allocation4 [shape = 's32[1]{0}', space=sflag, size = 0x4, scoped, tag = 'scoped memory for tpu_custom_call.1']
    #allocation5 [shape = 'u8[131072]{0}', space=vmem, size = 0x20000, scoped, tag = 'input window, operand 1, single buffered']
    #allocation6 [shape = 's32[1]{0}', space=sflag, size = 0x4, scoped, tag = 'scoped memory for tpu_custom_call.1']
    #allocation7 [shape = 'u8[2048]{0}', space=vmem, size = 0x800, scoped, tag = 'input window, operand 2, single buffered']
    #allocation8 [shape = 'u8[131072]{0}', space=vmem, size = 0x20000, scoped, tag = 'input window, operand 3, single buffered']
    #allocation9 [shape = 's32[1]{0}', space=sflag, size = 0x4, scoped, tag = 'scoped memory for tpu_custom_call.1']
    #allocation10 [shape = 'u8[4096]{0}', space=vmem, size = 0x1000, scoped, tag = 'output window, operand 0, single buffered']
    %10 = vsyncpa [#allocation3], 0
    %11 = vsyncpa [#allocation6], 0
    %12 = vsyncpa [#allocation9], 0
    %13 = vsyncpa [#allocation4], 0
    // Predicated region
    $region2: #{tpu_custom_call.1} parent=1 // pred_check
      _
    $region3: #{tpu_custom_call.1} parent=1 // pred_check_branch
      %15 = sbr.rel (0) target = $region5
    $region4: #{tpu_custom_call.1} parent=1 // pred_region
      %17 = vsyncadd [#allocation3], 0
      %s18 = sshll.u32 %s0, 4
      %s19 = int_to_ptr.hbm [resolvable:$true] %s18
      %s20 = sshll.u32 [#allocation2], 4
      %s21 = int_to_ptr.vmem [resolvable:$true] %s20
      %26 = dma.hbm_to_vmem [thread:$0]  %s19, 2048, %s21, [#allocation3], 128, 128, 8
    $region5: #{tpu_custom_call.1} parent=1 // pred_fallthru
      _
    // Predicated region
    $region6: #{tpu_custom_call.1} parent=1 // pred_check
      _
    $region7: #{tpu_custom_call.1} parent=1 // pred_check_branch
      %28 = sbr.rel (0) target = $region9
    $region8: #{tpu_custom_call.1} parent=1 // pred_region
      %30 = vsyncadd [#allocation6], 0
      %s31 = sshll.u32 %s1, 4
      %s32 = int_to_ptr.hbm [resolvable:$true] %s31
      %s33 = sshll.u32 [#allocation5], 4
      %s34 = int_to_ptr.vmem [resolvable:$true] %s33
      %39 = dma.hbm_to_vmem [thread:$0]  %s32, 4096, %s34, [#allocation6], 256, 256, 16
    $region9: #{tpu_custom_call.1} parent=1 // pred_fallthru
      _
    // Predicated region
    $region10: #{tpu_custom_call.1} parent=1 // pred_check
      _
    $region11: #{tpu_custom_call.1} parent=1 // pred_check_branch
      %41 = sbr.rel (0) target = $region13
    $region12: #{tpu_custom_call.1} parent=1 // pred_region
      %43 = vsyncadd [#allocation6], 0
      %s45 = sshll.u32 %s2, 4
      %s46 = int_to_ptr.hbm [resolvable:$true] %s45
      %s47 = sshll.u32 [#allocation7], 4
      %s48 = int_to_ptr.vmem [resolvable:$true] %s47
      %50 = dma.hbm_to_vmem [thread:$0]  %s46, 64, %s48, [#allocation6]
    $region13: #{tpu_custom_call.1} parent=1 // pred_fallthru
      _
    // Predicated region
    $region14: #{tpu_custom_call.1} parent=1 // pred_check
      _
    $region15: #{tpu_custom_call.1} parent=1 // pred_check_branch
      %52 = sbr.rel (0) target = $region17
    $region16: #{tpu_custom_call.1} parent=1 // pred_region
      %54 = vsyncadd [#allocation9], 0
      %s55 = sshll.u32 %s3, 4
      %s56 = int_to_ptr.hbm [resolvable:$true] %s55
      %s57 = sshll.u32 [#allocation8], 4
      %s58 = int_to_ptr.vmem [resolvable:$true] %s57
      %63 = dma.hbm_to_vmem [thread:$0]  %s56, 4096, %s58, [#allocation9], 64, 64, 4
    $region17: #{tpu_custom_call.1} parent=1 // pred_fallthru
      _
    // Predicated region
    $region18: #{tpu_custom_call.1} parent=1 // pred_check
      _
    $region19: #{tpu_custom_call.1} parent=1 // pred_check_branch
      %65 = sbr.rel (0) target = $region21
    $region20: #{tpu_custom_call.1} parent=1 // pred_region
      _
    $region21: #{tpu_custom_call.1} parent=1 // pred_fallthru
      _
    // Predicated region
    $region22: #{tpu_custom_call.1} parent=1 // pred_check
      _
    $region23: #{tpu_custom_call.1} parent=1 // pred_check_branch
      %67 = sbr.rel (0) target = $region25
    $region24: #{tpu_custom_call.1} parent=1 // pred_region
      %69 = dma.done [#allocation3], 2048
    $region25: #{tpu_custom_call.1} parent=1 // pred_fallthru
      _
    // Predicated region
    $region26: #{tpu_custom_call.1} parent=1 // pred_check
      _
    $region27: #{tpu_custom_call.1} parent=1 // pred_check_branch
      %71 = sbr.rel (0) target = $region29
    $region28: #{tpu_custom_call.1} parent=1 // pred_region
      %73 = dma.done [#allocation6], 4096
    $region29: #{tpu_custom_call.1} parent=1 // pred_fallthru
      _
    // Predicated region
    $region30: #{tpu_custom_call.1} parent=1 // pred_check
      _
    $region31: #{tpu_custom_call.1} parent=1 // pred_check_branch
      %75 = sbr.rel (0) target = $region33
    $region32: #{tpu_custom_call.1} parent=1 // pred_region
      %77 = dma.done [#allocation6], 64
    $region33: #{tpu_custom_call.1} parent=1 // pred_fallthru
      _
    // Predicated region
    $region34: #{tpu_custom_call.1} parent=1 // pred_check
      _
    $region35: #{tpu_custom_call.1} parent=1 // pred_check_branch
      %79 = sbr.rel (0) target = $region37
    $region36: #{tpu_custom_call.1} parent=1 // pred_region
      %81 = dma.done [#allocation9], 4096
    $region37: #{tpu_custom_call.1} parent=1 // pred_fallthru
      _
    %v82 = vld [vmem:[#allocation2] sm:$0xff]
    %v83 = vld [vmem:[#allocation2 + $0x8] sm:$0xff]
    %v84 = vld [vmem:[#allocation2 + $0x10] sm:$0xff]
    %v85 = vld [vmem:[#allocation2 + $0x18] sm:$0xff]
    %v86 = vld [vmem:[#allocation2 + $0x20] sm:$0xff]
    %v87 = vld [vmem:[#allocation2 + $0x28] sm:$0xff]
    %v88 = vld [vmem:[#allocation2 + $0x30] sm:$0xff]
    %v89 = vld [vmem:[#allocation2 + $0x38] sm:$0xff]
    %v90 = vld [vmem:[#allocation2 + $0x40] sm:$0xff]
    %v91 = vld [vmem:[#allocation2 + $0x48] sm:$0xff]
    %v92 = vld [vmem:[#allocation2 + $0x50] sm:$0xff]
    %v93 = vld [vmem:[#allocation2 + $0x58] sm:$0xff]
    %v94 = vld [vmem:[#allocation2 + $0x60] sm:$0xff]
    %v95 = vld [vmem:[#allocation2 + $0x68] sm:$0xff]
    %v96 = vld [vmem:[#allocation2 + $0x70] sm:$0xff]
    %v97 = vld [vmem:[#allocation2 + $0x78] sm:$0xff]
    %v98 = vadd.f32 %v82, %v83
    %v99 = vrot.slane %v98, 4
    %v100 = vadd.f32 %v98, %v99
    %v101 = vrot.slane %v100, 2
    %v102 = vadd.f32 %v100, %v101
    %v103 = vrot.slane %v102, 1
    %v104 = vadd.f32 %v102, %v103
    %v105 = vadd.f32 %v84, %v85
    %v106 = vrot.slane %v105, 4
    %v107 = vadd.f32 %v105, %v106
    %v108 = vrot.slane %v107, 2
    %v109 = vadd.f32 %v107, %v108
    %v110 = vrot.slane %v109, 1
    %v111 = vadd.f32 %v109, %v110
    %v112 = vadd.f32 %v86, %v87
    %v113 = vrot.slane %v112, 4
    %v114 = vadd.f32 %v112, %v113
    %v115 = vrot.slane %v114, 2
    %v116 = vadd.f32 %v114, %v115
    %v117 = vrot.slane %v116, 1
    %v118 = vadd.f32 %v116, %v117
    %v119 = vadd.f32 %v88, %v89
    %v120 = vrot.slane %v119, 4
    %v121 = vadd.f32 %v119, %v120
    %v122 = vrot.slane %v121, 2
    %v123 = vadd.f32 %v121, %v122
    %v124 = vrot.slane %v123, 1
    %v125 = vadd.f32 %v123, %v124
    %v126 = vadd.f32 %v90, %v91
    %v127 = vrot.slane %v126, 4
    %v128 = vadd.f32 %v126, %v127
    %v129 = vrot.slane %v128, 2
    %v130 = vadd.f32 %v128, %v129
    %v131 = vrot.slane %v130, 1
    %v132 = vadd.f32 %v130, %v131
    %v133 = vadd.f32 %v92, %v93
    %v134 = vrot.slane %v133, 4
    %v135 = vadd.f32 %v133, %v134
    %v136 = vrot.slane %v135, 2
    %v137 = vadd.f32 %v135, %v136
    %v138 = vrot.slane %v137, 1
    %v139 = vadd.f32 %v137, %v138
    %v140 = vadd.f32 %v94, %v95
    %v141 = vrot.slane %v140, 4
    %v142 = vadd.f32 %v140, %v141
    %v143 = vrot.slane %v142, 2
    %v144 = vadd.f32 %v142, %v143
    %v145 = vrot.slane %v144, 1
    %v146 = vadd.f32 %v144, %v145
    %v147 = vadd.f32 %v96, %v97
    %v148 = vrot.slane %v147, 4
    %v149 = vadd.f32 %v147, %v148
    %v150 = vrot.slane %v149, 2
    %v151 = vadd.f32 %v149, %v150
    %v152 = vrot.slane %v151, 1
    %v153 = vadd.f32 %v151, %v152
    %v154 = vpack.c.bf16 %v104, %v104
    %v155 = vpack.c.bf16 %v111, %v111
    %v156 = vpack.c.bf16 %v118, %v118
    %v157 = vpack.c.bf16 %v125, %v125
    %v158 = vpack.c.bf16 %v132, %v132
    %v159 = vpack.c.bf16 %v139, %v139
    %v160 = vpack.c.bf16 %v146, %v146
    %v161 = vpack.c.bf16 %v153, %v153
    %v162 = vld [vmem:[#allocation5] sm:$0xff]
    %v163 = vld [vmem:[#allocation5 + $0x8] sm:$0xff]
    %v164 = vld [vmem:[#allocation5 + $0x10] sm:$0xff]
    %v165 = vld [vmem:[#allocation5 + $0x18] sm:$0xff]
    %v166 = vld [vmem:[#allocation5 + $0x20] sm:$0xff]
    %v167 = vld [vmem:[#allocation5 + $0x28] sm:$0xff]
    %v168 = vld [vmem:[#allocation5 + $0x30] sm:$0xff]
    %v169 = vld [vmem:[#allocation5 + $0x38] sm:$0xff]
    %v170 = vld [vmem:[#allocation5 + $0x40] sm:$0xff]
    %v171 = vld [vmem:[#allocation5 + $0x48] sm:$0xff]
    %v172 = vld [vmem:[#allocation5 + $0x50] sm:$0xff]
    %v173 = vld [vmem:[#allocation5 + $0x58] sm:$0xff]
    %v174 = vld [vmem:[#allocation5 + $0x60] sm:$0xff]
    %v175 = vld [vmem:[#allocation5 + $0x68] sm:$0xff]
    %v176 = vld [vmem:[#allocation5 + $0x70] sm:$0xff]
    %v177 = vld [vmem:[#allocation5 + $0x78] sm:$0xff]
    %v178 = vld [vmem:[#allocation5 + $0x80] sm:$0xff]
    %v179 = vld [vmem:[#allocation5 + $0x88] sm:$0xff]
    %v180 = vld [vmem:[#allocation5 + $0x90] sm:$0xff]
    %v181 = vld [vmem:[#allocation5 + $0x98] sm:$0xff]
    %v182 = vld [vmem:[#allocation5 + $0xa0] sm:$0xff]
    %v183 = vld [vmem:[#allocation5 + $0xa8] sm:$0xff]
    %v184 = vld [vmem:[#allocation5 + $0xb0] sm:$0xff]
    %v185 = vld [vmem:[#allocation5 + $0xb8] sm:$0xff]
    %v186 = vld [vmem:[#allocation5 + $0xc0] sm:$0xff]
    %v187 = vld [vmem:[#allocation5 + $0xc8] sm:$0xff]
    %v188 = vld [vmem:[#allocation5 + $0xd0] sm:$0xff]
    %v189 = vld [vmem:[#allocation5 + $0xd8] sm:$0xff]
    %v190 = vld [vmem:[#allocation5 + $0xe0] sm:$0xff]
    %v191 = vld [vmem:[#allocation5 + $0xe8] sm:$0xff]
    %v192 = vld [vmem:[#allocation5 + $0xf0] sm:$0xff]
    %v193 = vld [vmem:[#allocation5 + $0xf8] sm:$0xff]
    %v194 = vld [vmem:[#allocation7] sm:$0xf]
    %v196 = vperm.slane %v194, 0
    %v197 = vperm.slane %v194, 1
    %v198 = vperm.slane %v194, 2
    %v199 = vperm.slane %v194, 3
    %v212 = vunpack.c.l.b16 %v154
    %v213 = vunpack.c.l.b16 %v155
    %v214 = vunpack.c.l.b16 %v156
    %v215 = vunpack.c.l.b16 %v157
    %v216 = vunpack.c.l.b16 %v158
    %v217 = vunpack.c.l.b16 %v159
    %v218 = vunpack.c.l.b16 %v160
    %v219 = vunpack.c.l.b16 %v161
    %vm220 = vcmask 1041409
    %v221 = vsel %vm220, %v213, %v212
    %vm222 = vcmask 1042434
    %v223 = vsel %vm222, %v214, %v221
    %vm224 = vcmask 1043459
    %v225 = vsel %vm224, %v215, %v223
    %vm226 = vcmask 1044484
    %v227 = vsel %vm226, %v216, %v225
    %vm228 = vcmask 1045509
    %v229 = vsel %vm228, %v217, %v227
    %vm230 = vcmask 1046534
    %v231 = vsel %vm230, %v218, %v229
    %vm232 = vcmask 1047559
    %v233 = vsel %vm232, %v219, %v231
    %v234 = vpack.c.b16 %v233, %v233
    %v268 = vunpack.c.l.b16 %v162
    %v269 = vunpack.c.h.b16 %v162
    %v270 = vunpack.c.l.b16 %v163
    %v271 = vunpack.c.h.b16 %v163
    %v272 = vunpack.c.l.b16 %v164
    %v273 = vunpack.c.h.b16 %v164
    %v274 = vunpack.c.l.b16 %v165
    %v275 = vunpack.c.h.b16 %v165
    %v276 = vunpack.c.l.b16 %v166
    %v277 = vunpack.c.h.b16 %v166
    %v278 = vunpack.c.l.b16 %v167
    %v279 = vunpack.c.h.b16 %v167
    %v280 = vunpack.c.l.b16 %v168
    %v281 = vunpack.c.h.b16 %v168
    %v282 = vunpack.c.l.b16 %v169
    %v283 = vunpack.c.h.b16 %v169
    %v284 = vunpack.c.l.b16 %v170
    %v285 = vunpack.c.h.b16 %v170
    %v286 = vunpack.c.l.b16 %v171
    %v287 = vunpack.c.h.b16 %v171
    %v288 = vunpack.c.l.b16 %v172
    %v289 = vunpack.c.h.b16 %v172
    %v290 = vunpack.c.l.b16 %v173
    %v291 = vunpack.c.h.b16 %v173
    %v292 = vunpack.c.l.b16 %v174
    %v293 = vunpack.c.h.b16 %v174
    %v294 = vunpack.c.l.b16 %v175
    %v295 = vunpack.c.h.b16 %v175
    %v296 = vunpack.c.l.b16 %v176
    %v297 = vunpack.c.h.b16 %v176
    %v298 = vunpack.c.l.b16 %v177
    %v299 = vunpack.c.h.b16 %v177
    %v300 = vunpack.c.l.b16 %v178
    %v301 = vunpack.c.h.b16 %v178
    %v302 = vunpack.c.l.b16 %v179
    %v303 = vunpack.c.h.b16 %v179
    %v304 = vunpack.c.l.b16 %v180
    %v305 = vunpack.c.h.b16 %v180
    %v306 = vunpack.c.l.b16 %v181
    %v307 = vunpack.c.h.b16 %v181
    %v308 = vunpack.c.l.b16 %v182
    %v309 = vunpack.c.h.b16 %v182
    %v310 = vunpack.c.l.b16 %v183
    %v311 = vunpack.c.h.b16 %v183
    %v312 = vunpack.c.l.b16 %v184
    %v313 = vunpack.c.h.b16 %v184
    %v314 = vunpack.c.l.b16 %v185
    %v315 = vunpack.c.h.b16 %v185
    %v316 = vunpack.c.l.b16 %v186
    %v317 = vunpack.c.h.b16 %v186
    %v318 = vunpack.c.l.b16 %v187
    %v319 = vunpack.c.h.b16 %v187
    %v320 = vunpack.c.l.b16 %v188
    %v321 = vunpack.c.h.b16 %v188
    %v322 = vunpack.c.l.b16 %v189
    %v323 = vunpack.c.h.b16 %v189
    %v324 = vunpack.c.l.b16 %v190
    %v325 = vunpack.c.h.b16 %v190
    %v326 = vunpack.c.l.b16 %v191
    %v327 = vunpack.c.h.b16 %v191
    %v328 = vunpack.c.l.b16 %v192
    %v329 = vunpack.c.h.b16 %v192
    %v330 = vunpack.c.l.b16 %v193
    %v331 = vunpack.c.h.b16 %v193
    %v332 = vpack.c.b16 %v272, %v268
    %v333 = vpack.c.b16 %v273, %v269
    %v334 = vpack.c.b16 %v274, %v270
    %v335 = vpack.c.b16 %v275, %v271
    %v336 = vpack.c.b16 %v280, %v276
    %v337 = vpack.c.b16 %v281, %v277
    %v338 = vpack.c.b16 %v282, %v278
    %v339 = vpack.c.b16 %v283, %v279
    %v340 = vpack.c.b16 %v288, %v284
    %v341 = vpack.c.b16 %v289, %v285
    %v342 = vpack.c.b16 %v290, %v286
    %v343 = vpack.c.b16 %v291, %v287
    %v344 = vpack.c.b16 %v296, %v292
    %v345 = vpack.c.b16 %v297, %v293
    %v346 = vpack.c.b16 %v298, %v294
    %v347 = vpack.c.b16 %v299, %v295
    %v348 = vpack.c.b16 %v304, %v300
    %v349 = vpack.c.b16 %v305, %v301
    %v350 = vpack.c.b16 %v306, %v302
    %v351 = vpack.c.b16 %v307, %v303
    %v352 = vpack.c.b16 %v312, %v308
    %v353 = vpack.c.b16 %v313, %v309
    %v354 = vpack.c.b16 %v314, %v310
    %v355 = vpack.c.b16 %v315, %v311
    %v356 = vpack.c.b16 %v320, %v316
    %v357 = vpack.c.b16 %v321, %v317
    %v358 = vpack.c.b16 %v322, %v318
    %v359 = vpack.c.b16 %v323, %v319
    %v360 = vpack.c.b16 %v328, %v324
    %v361 = vpack.c.b16 %v329, %v325
    %v362 = vpack.c.b16 %v330, %v326
    %v363 = vpack.c.b16 %v331, %v327
    %396 = vmatpush.bf16.msra.mxu0 %v360
    %397 = vmatpush.bf16.msra.mxu0 %v356
    %398 = vmatpush.bf16.msra.mxu0 %v352
    %399 = vmatpush.bf16.msra.mxu0 %v348
    %400 = vmatpush.bf16.msra.mxu0 %v344
    %401 = vmatpush.bf16.msra.mxu0 %v340
    %402 = vmatpush.bf16.msra.mxu0 %v336
    %403 = vmatpush.bf16.msra.mxu0 %v332
    %404 = vmatmul.bf16.gmra.mxu0 %v234
    %v405 = vpop.f32.mrf.mxu0
    %v406 = vadd.f32 %v196, %v405
    %v407 = vpop.f32.mrf.mxu0
    %408 = vdwg.mxu0
    %409 = vmatpush.bf16.msra.mxu0 %v361
    %410 = vmatpush.bf16.msra.mxu0 %v357
    %411 = vmatpush.bf16.msra.mxu0 %v353
    %412 = vmatpush.bf16.msra.mxu0 %v349
    %413 = vmatpush.bf16.msra.mxu0 %v345
    %414 = vmatpush.bf16.msra.mxu0 %v341
    %415 = vmatpush.bf16.msra.mxu0 %v337
    %416 = vmatpush.bf16.msra.mxu0 %v333
    %417 = vmatmul.bf16.gmra.mxu0 %v234
    %v418 = vpop.f32.mrf.mxu0
    %v419 = vadd.f32 %v197, %v418
    %v420 = vpop.f32.mrf.mxu0
    %421 = vdwg.mxu0
    %422 = vmatpush.bf16.msra.mxu0 %v362
    %423 = vmatpush.bf16.msra.mxu0 %v358
    %424 = vmatpush.bf16.msra.mxu0 %v354
    %425 = vmatpush.bf16.msra.mxu0 %v350
    %426 = vmatpush.bf16.msra.mxu0 %v346
    %427 = vmatpush.bf16.msra.mxu0 %v342
    %428 = vmatpush.bf16.msra.mxu0 %v338
    %429 = vmatpush.bf16.msra.mxu0 %v334
    %430 = vmatmul.bf16.gmra.mxu0 %v234
    %v431 = vpop.f32.mrf.mxu0
    %v432 = vadd.f32 %v198, %v431
    %v433 = vpop.f32.mrf.mxu0
    %434 = vdwg.mxu0
    %435 = vmatpush.bf16.msra.mxu0 %v363
    %436 = vmatpush.bf16.msra.mxu0 %v359
    %437 = vmatpush.bf16.msra.mxu0 %v355
    %438 = vmatpush.bf16.msra.mxu0 %v351
    %439 = vmatpush.bf16.msra.mxu0 %v347
    %440 = vmatpush.bf16.msra.mxu0 %v343
    %441 = vmatpush.bf16.msra.mxu0 %v339
    %442 = vmatpush.bf16.msra.mxu0 %v335
    %443 = vmatmul.bf16.gmra.mxu0 %v234
    %v444 = vpop.f32.mrf.mxu0
    %v445 = vadd.f32 %v199, %v444
    %v446 = vpop.f32.mrf.mxu0
    %447 = vdwg.mxu0
    %v448 = vmax.f32 %v406, 0.0
    %v449 = vmax.f32 %v419, 0.0
    %v450 = vmax.f32 %v432, 0.0
    %v451 = vmax.f32 %v445, 0.0
    %v452 = vpack.c.bf16 %v448, %v448
    %v453 = vpack.c.bf16 %v449, %v449
    %v454 = vpack.c.bf16 %v450, %v450
    %v455 = vpack.c.bf16 %v451, %v451
    %v456 = vld [vmem:[#allocation8] sm:$0xf]
    %v457 = vld [vmem:[#allocation8 + $0x4] sm:$0xf]
    %v458 = vld [vmem:[#allocation8 + $0x8] sm:$0xf]
    %v459 = vld [vmem:[#allocation8 + $0xc] sm:$0xf]
    %v460 = vld [vmem:[#allocation8 + $0x10] sm:$0xf]
    %v461 = vld [vmem:[#allocation8 + $0x14] sm:$0xf]
    %v462 = vld [vmem:[#allocation8 + $0x18] sm:$0xf]
    %v463 = vld [vmem:[#allocation8 + $0x1c] sm:$0xf]
    %v464 = vld [vmem:[#allocation8 + $0x20] sm:$0xf]
    %v465 = vld [vmem:[#allocation8 + $0x24] sm:$0xf]
    %v466 = vld [vmem:[#allocation8 + $0x28] sm:$0xf]
    %v467 = vld [vmem:[#allocation8 + $0x2c] sm:$0xf]
    %v468 = vld [vmem:[#allocation8 + $0x30] sm:$0xf]
    %v469 = vld [vmem:[#allocation8 + $0x34] sm:$0xf]
    %v470 = vld [vmem:[#allocation8 + $0x38] sm:$0xf]
    %v471 = vld [vmem:[#allocation8 + $0x3c] sm:$0xf]
    %v472 = vld [vmem:[#allocation8 + $0x40] sm:$0xf]
    %v473 = vld [vmem:[#allocation8 + $0x44] sm:$0xf]
    %v474 = vld [vmem:[#allocation8 + $0x48] sm:$0xf]
    %v475 = vld [vmem:[#allocation8 + $0x4c] sm:$0xf]
    %v476 = vld [vmem:[#allocation8 + $0x50] sm:$0xf]
    %v477 = vld [vmem:[#allocation8 + $0x54] sm:$0xf]
    %v478 = vld [vmem:[#allocation8 + $0x58] sm:$0xf]
    %v479 = vld [vmem:[#allocation8 + $0x5c] sm:$0xf]
    %v480 = vld [vmem:[#allocation8 + $0x60] sm:$0xf]
    %v481 = vld [vmem:[#allocation8 + $0x64] sm:$0xf]
    %v482 = vld [vmem:[#allocation8 + $0x68] sm:$0xf]
    %v483 = vld [vmem:[#allocation8 + $0x6c] sm:$0xf]
    %v484 = vld [vmem:[#allocation8 + $0x70] sm:$0xf]
    %v485 = vld [vmem:[#allocation8 + $0x74] sm:$0xf]
    %v486 = vld [vmem:[#allocation8 + $0x78] sm:$0xf]
    %v487 = vld [vmem:[#allocation8 + $0x7c] sm:$0xf]
    %v488 = vld [vmem:[#allocation8 + $0x80] sm:$0xf]
    %v489 = vld [vmem:[#allocation8 + $0x84] sm:$0xf]
    %v490 = vld [vmem:[#allocation8 + $0x88] sm:$0xf]
    %v491 = vld [vmem:[#allocation8 + $0x8c] sm:$0xf]
    %v492 = vld [vmem:[#allocation8 + $0x90] sm:$0xf]
    %v493 = vld [vmem:[#allocation8 + $0x94] sm:$0xf]
    %v494 = vld [vmem:[#allocation8 + $0x98] sm:$0xf]
    %v495 = vld [vmem:[#allocation8 + $0x9c] sm:$0xf]
    %v496 = vld [vmem:[#allocation8 + $0xa0] sm:$0xf]
    %v497 = vld [vmem:[#allocation8 + $0xa4] sm:$0xf]
    %v498 = vld [vmem:[#allocation8 + $0xa8] sm:$0xf]
    %v499 = vld [vmem:[#allocation8 + $0xac] sm:$0xf]
    %v500 = vld [vmem:[#allocation8 + $0xb0] sm:$0xf]
    %v501 = vld [vmem:[#allocation8 + $0xb4] sm:$0xf]
    %v502 = vld [vmem:[#allocation8 + $0xb8] sm:$0xf]
    %v503 = vld [vmem:[#allocation8 + $0xbc] sm:$0xf]
    %v504 = vld [vmem:[#allocation8 + $0xc0] sm:$0xf]
    %v505 = vld [vmem:[#allocation8 + $0xc4] sm:$0xf]
    %v506 = vld [vmem:[#allocation8 + $0xc8] sm:$0xf]
    %v507 = vld [vmem:[#allocation8 + $0xcc] sm:$0xf]
    %v508 = vld [vmem:[#allocation8 + $0xd0] sm:$0xf]
    %v509 = vld [vmem:[#allocation8 + $0xd4] sm:$0xf]
    %v510 = vld [vmem:[#allocation8 + $0xd8] sm:$0xf]
    %v511 = vld [vmem:[#allocation8 + $0xdc] sm:$0xf]
    %v512 = vld [vmem:[#allocation8 + $0xe0] sm:$0xf]
    %v513 = vld [vmem:[#allocation8 + $0xe4] sm:$0xf]
    %v514 = vld [vmem:[#allocation8 + $0xe8] sm:$0xf]
    %v515 = vld [vmem:[#allocation8 + $0xec] sm:$0xf]
    %v516 = vld [vmem:[#allocation8 + $0xf0] sm:$0xf]
    %v517 = vld [vmem:[#allocation8 + $0xf4] sm:$0xf]
    %v518 = vld [vmem:[#allocation8 + $0xf8] sm:$0xf]
    %v519 = vld [vmem:[#allocation8 + $0xfc] sm:$0xf]
    %v520 = vld [vmem:[%s4] sm:$0x1]
    %v522 = vperm.slane %v520, 0
    %v588 = vunpack.c.l.b16 %v456
    %v589 = vunpack.c.l.b16 %v457
    %v590 = vunpack.c.l.b16 %v458
    %v591 = vunpack.c.l.b16 %v459
    %v592 = vunpack.c.l.b16 %v460
    %v593 = vunpack.c.l.b16 %v461
    %v594 = vunpack.c.l.b16 %v462
    %v595 = vunpack.c.l.b16 %v463
    %v596 = vunpack.c.l.b16 %v464
    %v597 = vunpack.c.l.b16 %v465
    %v598 = vunpack.c.l.b16 %v466
    %v599 = vunpack.c.l.b16 %v467
    %v600 = vunpack.c.l.b16 %v468
    %v601 = vunpack.c.l.b16 %v469
    %v602 = vunpack.c.l.b16 %v470
    %v603 = vunpack.c.l.b16 %v471
    %v604 = vunpack.c.l.b16 %v472
    %v605 = vunpack.c.l.b16 %v473
    %v606 = vunpack.c.l.b16 %v474
    %v607 = vunpack.c.l.b16 %v475
    %v608 = vunpack.c.l.b16 %v476
    %v609 = vunpack.c.l.b16 %v477
    %v610 = vunpack.c.l.b16 %v478
    %v611 = vunpack.c.l.b16 %v479
    %v612 = vunpack.c.l.b16 %v480
    %v613 = vunpack.c.l.b16 %v481
    %v614 = vunpack.c.l.b16 %v482
    %v615 = vunpack.c.l.b16 %v483
    %v616 = vunpack.c.l.b16 %v484
    %v617 = vunpack.c.l.b16 %v485
    %v618 = vunpack.c.l.b16 %v486
    %v619 = vunpack.c.l.b16 %v487
    %v620 = vunpack.c.l.b16 %v488
    %v621 = vunpack.c.l.b16 %v489
    %v622 = vunpack.c.l.b16 %v490
    %v623 = vunpack.c.l.b16 %v491
    %v624 = vunpack.c.l.b16 %v492
    %v625 = vunpack.c.l.b16 %v493
    %v626 = vunpack.c.l.b16 %v494
    %v627 = vunpack.c.l.b16 %v495
    %v628 = vunpack.c.l.b16 %v496
    %v629 = vunpack.c.l.b16 %v497
    %v630 = vunpack.c.l.b16 %v498
    %v631 = vunpack.c.l.b16 %v499
    %v632 = vunpack.c.l.b16 %v500
    %v633 = vunpack.c.l.b16 %v501
    %v634 = vunpack.c.l.b16 %v502
    %v635 = vunpack.c.l.b16 %v503
    %v636 = vunpack.c.l.b16 %v504
    %v637 = vunpack.c.l.b16 %v505
    %v638 = vunpack.c.l.b16 %v506
    %v639 = vunpack.c.l.b16 %v507
    %v640 = vunpack.c.l.b16 %v508
    %v641 = vunpack.c.l.b16 %v509
    %v642 = vunpack.c.l.b16 %v510
    %v643 = vunpack.c.l.b16 %v511
    %v644 = vunpack.c.l.b16 %v512
    %v645 = vunpack.c.l.b16 %v513
    %v646 = vunpack.c.l.b16 %v514
    %v647 = vunpack.c.l.b16 %v515
    %v648 = vunpack.c.l.b16 %v516
    %v649 = vunpack.c.l.b16 %v517
    %v650 = vunpack.c.l.b16 %v518
    %v651 = vunpack.c.l.b16 %v519
    %v652 = vpack.c.b16 %v589, %v588
    %v653 = vpack.c.b16 %v591, %v590
    %v654 = vpack.c.b16 %v593, %v592
    %v655 = vpack.c.b16 %v595, %v594
    %v656 = vpack.c.b16 %v597, %v596
    %v657 = vpack.c.b16 %v599, %v598
    %v658 = vpack.c.b16 %v601, %v600
    %v659 = vpack.c.b16 %v603, %v602
    %v660 = vpack.c.b16 %v605, %v604
    %v661 = vpack.c.b16 %v607, %v606
    %v662 = vpack.c.b16 %v609, %v608
    %v663 = vpack.c.b16 %v611, %v610
    %v664 = vpack.c.b16 %v613, %v612
    %v665 = vpack.c.b16 %v615, %v614
    %v666 = vpack.c.b16 %v617, %v616
    %v667 = vpack.c.b16 %v619, %v618
    %v668 = vpack.c.b16 %v621, %v620
    %v669 = vpack.c.b16 %v623, %v622
    %v670 = vpack.c.b16 %v625, %v624
    %v671 = vpack.c.b16 %v627, %v626
    %v672 = vpack.c.b16 %v629, %v628
    %v673 = vpack.c.b16 %v631, %v630
    %v674 = vpack.c.b16 %v633, %v632
    %v675 = vpack.c.b16 %v635, %v634
    %v676 = vpack.c.b16 %v637, %v636
    %v677 = vpack.c.b16 %v639, %v638
    %v678 = vpack.c.b16 %v641, %v640
    %v679 = vpack.c.b16 %v643, %v642
    %v680 = vpack.c.b16 %v645, %v644
    %v681 = vpack.c.b16 %v647, %v646
    %v682 = vpack.c.b16 %v649, %v648
    %v683 = vpack.c.b16 %v651, %v650
    %716 = vmatpush.bf16.msra.mxu0 %v659
    %717 = vmatpush.bf16.msra.mxu0 %v658
    %718 = vmatpush.bf16.msra.mxu0 %v657
    %719 = vmatpush.bf16.msra.mxu0 %v656
    %720 = vmatpush.bf16.msra.mxu0 %v655
    %721 = vmatpush.bf16.msra.mxu0 %v654
    %722 = vmatpush.bf16.msra.mxu0 %v653
    %723 = vmatpush.bf16.msra.mxu0 %v652
    %724 = vmatmul.bf16.gmra.mxu0 %v452
    %v725 = vpop.f32.mrf.mxu0
    %v726 = vadd.f32 %v522, %v725
    %v727 = vpop.f32.mrf.mxu0
    %728 = vdwg.mxu0
    %729 = vmatpush.bf16.msra.mxu0 %v667
    %730 = vmatpush.bf16.msra.mxu0 %v666
    %731 = vmatpush.bf16.msra.mxu0 %v665
    %732 = vmatpush.bf16.msra.mxu0 %v664
    %733 = vmatpush.bf16.msra.mxu0 %v663
    %734 = vmatpush.bf16.msra.mxu0 %v662
    %735 = vmatpush.bf16.msra.mxu0 %v661
    %736 = vmatpush.bf16.msra.mxu0 %v660
    %737 = vmatmul.bf16.gmra.mxu0 %v453
    %v738 = vpop.f32.mrf.mxu0
    %v739 = vadd.f32 %v726, %v738
    %v740 = vpop.f32.mrf.mxu0
    %741 = vdwg.mxu0
    %742 = vmatpush.bf16.msra.mxu0 %v675
    %743 = vmatpush.bf16.msra.mxu0 %v674
    %744 = vmatpush.bf16.msra.mxu0 %v673
    %745 = vmatpush.bf16.msra.mxu0 %v672
    %746 = vmatpush.bf16.msra.mxu0 %v671
    %747 = vmatpush.bf16.msra.mxu0 %v670
    %748 = vmatpush.bf16.msra.mxu0 %v669
    %749 = vmatpush.bf16.msra.mxu0 %v668
    %750 = vmatmul.bf16.gmra.mxu0 %v454
    %v751 = vpop.f32.mrf.mxu0
    %v752 = vadd.f32 %v739, %v751
    %v753 = vpop.f32.mrf.mxu0
    %754 = vdwg.mxu0
    %755 = vmatpush.bf16.msra.mxu0 %v683
    %756 = vmatpush.bf16.msra.mxu0 %v682
    %757 = vmatpush.bf16.msra.mxu0 %v681
    %758 = vmatpush.bf16.msra.mxu0 %v680
    %759 = vmatpush.bf16.msra.mxu0 %v679
    %760 = vmatpush.bf16.msra.mxu0 %v678
    %761 = vmatpush.bf16.msra.mxu0 %v677
    %762 = vmatpush.bf16.msra.mxu0 %v676
    %763 = vmatmul.bf16.gmra.mxu0 %v455
    %v764 = vpop.f32.mrf.mxu0
    %v765 = vadd.f32 %v752, %v764
    %v766 = vpop.f32.mrf.mxu0
    %767 = vdwg.mxu0
    %768 = vst [vmem:[#allocation10] sm:$0xff] %v765
    // Predicated region
    $region38: #{tpu_custom_call.1} parent=1 // pred_check
      _
    $region39: #{tpu_custom_call.1} parent=1 // pred_check_branch
      %770 = sbr.rel (0) target = $region41
    $region40: #{tpu_custom_call.1} parent=1 // pred_region
      %772 = vsyncadd [#allocation4], 0
      %s774 = sshll.u32 [#allocation10], 4
      %s775 = int_to_ptr.vmem [resolvable:$true] %s774
      %s776 = sshll.u32 %s5, 4
      %s777 = int_to_ptr.hbm [resolvable:$true] %s776
      %779 = dma.vmem_to_hbm [thread:$0]  %s775, 128, %s777, [#allocation4]
    $region41: #{tpu_custom_call.1} parent=1 // pred_fallthru
      _
    // Predicated region
    $region42: #{tpu_custom_call.1} parent=1 // pred_check
      _
    $region43: #{tpu_custom_call.1} parent=1 // pred_check_branch
      %781 = sbr.rel (0) target = $region45
    $region44: #{tpu_custom_call.1} parent=1 // pred_region
      %783 = dma.done [#allocation4], 128
    $region45: #{tpu_custom_call.1} parent=1 // pred_fallthru
      _
    %784 = vsyncpa [#allocation3], 1
    %785 = vsyncpa [#allocation6], 1
    %786 = vsyncpa [#allocation9], 1
    %787 = vsyncpa [#allocation4], 1

// kernel: tpu_custom_call.1
$region0: #{tpu_custom_call.1}
  #allocation0 [shape = 'u32[]', space=smem, size = 0x4, offset = 0x4, fixed_abs, tag = 'smem constant byte address 0x4 - core index']
  #allocation1 [shape = 'u32[72,128]{1,0:T(1,128)}', space=vmem, size = 0x9000, scoped, tag = 'internal scratch']
  %s0 = inlined_call_operand.hbm [shape: f32[8,16,128], index: 0, kind: input, shape index: {}]
  %s1 = inlined_call_operand.hbm [shape: bf16[128,512], index: 1, kind: input, shape index: {}]
  %s2 = inlined_call_operand.hbm [shape: f32[1,512], index: 2, kind: input, shape index: {}]
  %s3 = inlined_call_operand.hbm [shape: bf16[512,128], index: 3, kind: input, shape index: {}]
  %s4 = inlined_call_operand.vmem [shape: f32[1,128], index: 4, kind: input, shape index: {}]
  %s5 = inlined_call_operand.hbm [shape: f32[8,128], index: 5, kind: output, shape index: {}]
  %s6 = sld [smem:[#allocation0]]
  $region46: #{tpu_custom_call.1} parent=0
    _
  %s8 = ssub.s32 1, %s6
  %s9 = scalar_select 0, %s8, %s6
  $region1: #{tpu_custom_call.1} parent=0
    #allocation2 [shape = 'u8[65536]{0}', space=vmem, size = 0x10000, scoped, tag = 'input window, operand 0, single buffered']
    #allocation3 [shape = 's32[1]{0}', space=sflag, size = 0x4, scoped, tag = 'scoped memory for tpu_custom_call.1']
    #allocation4 [shape = 's32[1]{0}', space=sflag, size = 0x4, scoped, tag = 'scoped memory for tpu_custom_call.1']
    #allocation5 [shape = 'u8[131072]{0}', space=vmem, size = 0x20000, scoped, tag = 'input window, operand 1, single buffered']
    #allocation6 [shape = 's32[1]{0}', space=sflag, size = 0x4, scoped, tag = 'scoped memory for tpu_custom_call.1']
    #allocation7 [shape = 'u8[2048]{0}', space=vmem, size = 0x800, scoped, tag = 'input window, operand 2, single buffered']
    #allocation8 [shape = 'u8[131072]{0}', space=vmem, size = 0x20000, scoped, tag = 'input window, operand 3, single buffered']
    #allocation9 [shape = 's32[1]{0}', space=sflag, size = 0x4, scoped, tag = 'scoped memory for tpu_custom_call.1']
    #allocation10 [shape = 'u8[4096]{0}', space=vmem, size = 0x1000, scoped, tag = 'output window, operand 0, single buffered']
    %10 = vsyncpa [#allocation3], 0
    %11 = vsyncpa [#allocation6], 0
    %12 = vsyncpa [#allocation9], 0
    %13 = vsyncpa [#allocation4], 0
    // Predicated region
    $region2: #{tpu_custom_call.1} parent=1 // pred_check
      _
    $region3: #{tpu_custom_call.1} parent=1 // pred_check_branch
      %15 = sbr.rel (0) target = $region5
    $region4: #{tpu_custom_call.1} parent=1 // pred_region
      %17 = vsyncadd [#allocation3], 0
      %s18 = sshll.u32 %s0, 4
      %s19 = int_to_ptr.hbm [resolvable:$true] %s18
      %s20 = sshll.u32 [#allocation2], 4
      %s21 = int_to_ptr.vmem [resolvable:$true] %s20
      %26 = dma.hbm_to_vmem [thread:$0]  %s19, 2048, %s21, [#allocation3], 128, 128, 8
    $region5: #{tpu_custom_call.1} parent=1 // pred_fallthru
      _
    // Predicated region
    $region6: #{tpu_custom_call.1} parent=1 // pred_check
      _
    $region7: #{tpu_custom_call.1} parent=1 // pred_check_branch
      %28 = sbr.rel (0) target = $region9
    $region8: #{tpu_custom_call.1} parent=1 // pred_region
      %30 = vsyncadd [#allocation6], 0
      %s31 = sshll.u32 %s1, 4
      %s32 = int_to_ptr.hbm [resolvable:$true] %s31
      %s33 = sshll.u32 [#allocation5], 4
      %s34 = int_to_ptr.vmem [resolvable:$true] %s33
      %39 = dma.hbm_to_vmem [thread:$0]  %s32, 4096, %s34, [#allocation6], 256, 256, 16
    $region9: #{tpu_custom_call.1} parent=1 // pred_fallthru
      _
    // Predicated region
    $region10: #{tpu_custom_call.1} parent=1 // pred_check
      _
    $region11: #{tpu_custom_call.1} parent=1 // pred_check_branch
      %41 = sbr.rel (0) target = $region13
    $region12: #{tpu_custom_call.1} parent=1 // pred_region
      %43 = vsyncadd [#allocation6], 0
      %s45 = sshll.u32 %s2, 4
      %s46 = int_to_ptr.hbm [resolvable:$true] %s45
      %s47 = sshll.u32 [#allocation7], 4
      %s48 = int_to_ptr.vmem [resolvable:$true] %s47
      %50 = dma.hbm_to_vmem [thread:$0]  %s46, 64, %s48, [#allocation6]
    $region13: #{tpu_custom_call.1} parent=1 // pred_fallthru
      _
    // Predicated region
    $region14: #{tpu_custom_call.1} parent=1 // pred_check
      _
    $region15: #{tpu_custom_call.1} parent=1 // pred_check_branch
      %52 = sbr.rel (0) target = $region17
    $region16: #{tpu_custom_call.1} parent=1 // pred_region
      %54 = vsyncadd [#allocation9], 0
      %s55 = sshll.u32 %s3, 4
      %s56 = int_to_ptr.hbm [resolvable:$true] %s55
      %s57 = sshll.u32 [#allocation8], 4
      %s58 = int_to_ptr.vmem [resolvable:$true] %s57
      %63 = dma.hbm_to_vmem [thread:$0]  %s56, 4096, %s58, [#allocation9], 64, 64, 4
    $region17: #{tpu_custom_call.1} parent=1 // pred_fallthru
      _
    // Predicated region
    $region18: #{tpu_custom_call.1} parent=1 // pred_check
      _
    $region19: #{tpu_custom_call.1} parent=1 // pred_check_branch
      %65 = sbr.rel (0) target = $region21
    $region20: #{tpu_custom_call.1} parent=1 // pred_region
      _
    $region21: #{tpu_custom_call.1} parent=1 // pred_fallthru
      _
    // Predicated region
    $region22: #{tpu_custom_call.1} parent=1 // pred_check
      _
    $region23: #{tpu_custom_call.1} parent=1 // pred_check_branch
      %67 = sbr.rel (0) target = $region25
    $region24: #{tpu_custom_call.1} parent=1 // pred_region
      %69 = dma.done [#allocation3], 2048
    $region25: #{tpu_custom_call.1} parent=1 // pred_fallthru
      _
    // Predicated region
    $region26: #{tpu_custom_call.1} parent=1 // pred_check
      _
    $region27: #{tpu_custom_call.1} parent=1 // pred_check_branch
      %71 = sbr.rel (0) target = $region29
    $region28: #{tpu_custom_call.1} parent=1 // pred_region
      %73 = dma.done [#allocation6], 4096
    $region29: #{tpu_custom_call.1} parent=1 // pred_fallthru
      _
    // Predicated region
    $region30: #{tpu_custom_call.1} parent=1 // pred_check
      _
    $region31: #{tpu_custom_call.1} parent=1 // pred_check_branch
      %75 = sbr.rel (0) target = $region33
    $region32: #{tpu_custom_call.1} parent=1 // pred_region
      %77 = dma.done [#allocation6], 64
    $region33: #{tpu_custom_call.1} parent=1 // pred_fallthru
      _
    // Predicated region
    $region34: #{tpu_custom_call.1} parent=1 // pred_check
      _
    $region35: #{tpu_custom_call.1} parent=1 // pred_check_branch
      %79 = sbr.rel (0) target = $region37
    $region36: #{tpu_custom_call.1} parent=1 // pred_region
      %81 = dma.done [#allocation9], 4096
    $region37: #{tpu_custom_call.1} parent=1 // pred_fallthru
      _
    %v82 = vld [vmem:[#allocation2] sm:$0xff]
    %v83 = vld [vmem:[#allocation2 + $0x8] sm:$0xff]
    %v84 = vld [vmem:[#allocation2 + $0x10] sm:$0xff]
    %v85 = vld [vmem:[#allocation2 + $0x18] sm:$0xff]
    %v86 = vld [vmem:[#allocation2 + $0x20] sm:$0xff]
    %v87 = vld [vmem:[#allocation2 + $0x28] sm:$0xff]
    %v88 = vld [vmem:[#allocation2 + $0x30] sm:$0xff]
    %v89 = vld [vmem:[#allocation2 + $0x38] sm:$0xff]
    %v90 = vld [vmem:[#allocation2 + $0x40] sm:$0xff]
    %v91 = vld [vmem:[#allocation2 + $0x48] sm:$0xff]
    %v92 = vld [vmem:[#allocation2 + $0x50] sm:$0xff]
    %v93 = vld [vmem:[#allocation2 + $0x58] sm:$0xff]
    %v94 = vld [vmem:[#allocation2 + $0x60] sm:$0xff]
    %v95 = vld [vmem:[#allocation2 + $0x68] sm:$0xff]
    %v96 = vld [vmem:[#allocation2 + $0x70] sm:$0xff]
    %v97 = vld [vmem:[#allocation2 + $0x78] sm:$0xff]
    %v98 = vadd.f32 %v82, %v83
    %v99 = vrot.slane %v98, 4
    %v100 = vadd.f32 %v98, %v99
    %v101 = vrot.slane %v100, 2
    %v102 = vadd.f32 %v100, %v101
    %v103 = vrot.slane %v102, 1
    %v104 = vadd.f32 %v102, %v103
    %v105 = vadd.f32 %v84, %v85
    %v106 = vrot.slane %v105, 4
    %v107 = vadd.f32 %v105, %v106
    %v108 = vrot.slane %v107, 2
    %v109 = vadd.f32 %v107, %v108
    %v110 = vrot.slane %v109, 1
    %v111 = vadd.f32 %v109, %v110
    %v112 = vadd.f32 %v86, %v87
    %v113 = vrot.slane %v112, 4
    %v114 = vadd.f32 %v112, %v113
    %v115 = vrot.slane %v114, 2
    %v116 = vadd.f32 %v114, %v115
    %v117 = vrot.slane %v116, 1
    %v118 = vadd.f32 %v116, %v117
    %v119 = vadd.f32 %v88, %v89
    %v120 = vrot.slane %v119, 4
    %v121 = vadd.f32 %v119, %v120
    %v122 = vrot.slane %v121, 2
    %v123 = vadd.f32 %v121, %v122
    %v124 = vrot.slane %v123, 1
    %v125 = vadd.f32 %v123, %v124
    %v126 = vadd.f32 %v90, %v91
    %v127 = vrot.slane %v126, 4
    %v128 = vadd.f32 %v126, %v127
    %v129 = vrot.slane %v128, 2
    %v130 = vadd.f32 %v128, %v129
    %v131 = vrot.slane %v130, 1
    %v132 = vadd.f32 %v130, %v131
    %v133 = vadd.f32 %v92, %v93
    %v134 = vrot.slane %v133, 4
    %v135 = vadd.f32 %v133, %v134
    %v136 = vrot.slane %v135, 2
    %v137 = vadd.f32 %v135, %v136
    %v138 = vrot.slane %v137, 1
    %v139 = vadd.f32 %v137, %v138
    %v140 = vadd.f32 %v94, %v95
    %v141 = vrot.slane %v140, 4
    %v142 = vadd.f32 %v140, %v141
    %v143 = vrot.slane %v142, 2
    %v144 = vadd.f32 %v142, %v143
    %v145 = vrot.slane %v144, 1
    %v146 = vadd.f32 %v144, %v145
    %v147 = vadd.f32 %v96, %v97
    %v148 = vrot.slane %v147, 4
    %v149 = vadd.f32 %v147, %v148
    %v150 = vrot.slane %v149, 2
    %v151 = vadd.f32 %v149, %v150
    %v152 = vrot.slane %v151, 1
    %v153 = vadd.f32 %v151, %v152
    %v154 = vpack.c.bf16 %v104, %v104
    %v155 = vpack.c.bf16 %v111, %v111
    %v156 = vpack.c.bf16 %v118, %v118
    %v157 = vpack.c.bf16 %v125, %v125
    %v158 = vpack.c.bf16 %v132, %v132
    %v159 = vpack.c.bf16 %v139, %v139
    %v160 = vpack.c.bf16 %v146, %v146
    %v161 = vpack.c.bf16 %v153, %v153
    %v162 = vld [vmem:[#allocation5] sm:$0xff]
    %v163 = vld [vmem:[#allocation5 + $0x8] sm:$0xff]
    %v164 = vld [vmem:[#allocation5 + $0x10] sm:$0xff]
    %v165 = vld [vmem:[#allocation5 + $0x18] sm:$0xff]
    %v166 = vld [vmem:[#allocation5 + $0x20] sm:$0xff]
    %v167 = vld [vmem:[#allocation5 + $0x28] sm:$0xff]
    %v168 = vld [vmem:[#allocation5 + $0x30] sm:$0xff]
    %v169 = vld [vmem:[#allocation5 + $0x38] sm:$0xff]
    %v170 = vld [vmem:[#allocation5 + $0x40] sm:$0xff]
    %v171 = vld [vmem:[#allocation5 + $0x48] sm:$0xff]
    %v172 = vld [vmem:[#allocation5 + $0x50] sm:$0xff]
    %v173 = vld [vmem:[#allocation5 + $0x58] sm:$0xff]
    %v174 = vld [vmem:[#allocation5 + $0x60] sm:$0xff]
    %v175 = vld [vmem:[#allocation5 + $0x68] sm:$0xff]
    %v176 = vld [vmem:[#allocation5 + $0x70] sm:$0xff]
    %v177 = vld [vmem:[#allocation5 + $0x78] sm:$0xff]
    %v178 = vld [vmem:[#allocation5 + $0x80] sm:$0xff]
    %v179 = vld [vmem:[#allocation5 + $0x88] sm:$0xff]
    %v180 = vld [vmem:[#allocation5 + $0x90] sm:$0xff]
    %v181 = vld [vmem:[#allocation5 + $0x98] sm:$0xff]
    %v182 = vld [vmem:[#allocation5 + $0xa0] sm:$0xff]
    %v183 = vld [vmem:[#allocation5 + $0xa8] sm:$0xff]
    %v184 = vld [vmem:[#allocation5 + $0xb0] sm:$0xff]
    %v185 = vld [vmem:[#allocation5 + $0xb8] sm:$0xff]
    %v186 = vld [vmem:[#allocation5 + $0xc0] sm:$0xff]
    %v187 = vld [vmem:[#allocation5 + $0xc8] sm:$0xff]
    %v188 = vld [vmem:[#allocation5 + $0xd0] sm:$0xff]
    %v189 = vld [vmem:[#allocation5 + $0xd8] sm:$0xff]
    %v190 = vld [vmem:[#allocation5 + $0xe0] sm:$0xff]
    %v191 = vld [vmem:[#allocation5 + $0xe8] sm:$0xff]
    %v192 = vld [vmem:[#allocation5 + $0xf0] sm:$0xff]
    %v193 = vld [vmem:[#allocation5 + $0xf8] sm:$0xff]
    %v194 = vld [vmem:[#allocation7] sm:$0xf]
    %v196 = vperm.slane %v194, 0
    %v197 = vperm.slane %v194, 1
    %v198 = vperm.slane %v194, 2
    %v199 = vperm.slane %v194, 3
    %v212 = vunpack.c.l.b16 %v154
    %v213 = vunpack.c.l.b16 %v155
    %v214 = vunpack.c.l.b16 %v156
    %v215 = vunpack.c.l.b16 %v157
    %v216 = vunpack.c.l.b16 %v158
    %v217 = vunpack.c.l.b16 %v159
    %v218 = vunpack.c.l.b16 %v160
    %v219 = vunpack.c.l.b16 %v161
    %vm220 = vcmask 1041409
    %v221 = vsel %vm220, %v213, %v212
    %vm222 = vcmask 1042434
    %v223 = vsel %vm222, %v214, %v221
    %vm224 = vcmask 1043459
    %v225 = vsel %vm224, %v215, %v223
    %vm226 = vcmask 1044484
    %v227 = vsel %vm226, %v216, %v225
    %vm228 = vcmask 1045509
    %v229 = vsel %vm228, %v217, %v227
    %vm230 = vcmask 1046534
    %v231 = vsel %vm230, %v218, %v229
    %vm232 = vcmask 1047559
    %v233 = vsel %vm232, %v219, %v231
    %v234 = vpack.c.b16 %v233, %v233
    %v268 = vunpack.c.l.b16 %v162
    %v269 = vunpack.c.h.b16 %v162
    %v270 = vunpack.c.l.b16 %v163
    %v271 = vunpack.c.h.b16 %v163
    %v272 = vunpack.c.l.b16 %v164
    %v273 = vunpack.c.h.b16 %v164
    %v274 = vunpack.c.l.b16 %v165
    %v275 = vunpack.c.h.b16 %v165
    %v276 = vunpack.c.l.b16 %v166
    %v277 = vunpack.c.h.b16 %v166
    %v278 = vunpack.c.l.b16 %v167
    %v279 = vunpack.c.h.b16 %v167
    %v280 = vunpack.c.l.b16 %v168
    %v281 = vunpack.c.h.b16 %v168
    %v282 = vunpack.c.l.b16 %v169
    %v283 = vunpack.c.h.b16 %v169
    %v284 = vunpack.c.l.b16 %v170
    %v285 = vunpack.c.h.b16 %v170
    %v286 = vunpack.c.l.b16 %v171
    %v287 = vunpack.c.h.b16 %v171
    %v288 = vunpack.c.l.b16 %v172
    %v289 = vunpack.c.h.b16 %v172
    %v290 = vunpack.c.l.b16 %v173
    %v291 = vunpack.c.h.b16 %v173
    %v292 = vunpack.c.l.b16 %v174
    %v293 = vunpack.c.h.b16 %v174
    %v294 = vunpack.c.l.b16 %v175
    %v295 = vunpack.c.h.b16 %v175
    %v296 = vunpack.c.l.b16 %v176
    %v297 = vunpack.c.h.b16 %v176
    %v298 = vunpack.c.l.b16 %v177
    %v299 = vunpack.c.h.b16 %v177
    %v300 = vunpack.c.l.b16 %v178
    %v301 = vunpack.c.h.b16 %v178
    %v302 = vunpack.c.l.b16 %v179
    %v303 = vunpack.c.h.b16 %v179
    %v304 = vunpack.c.l.b16 %v180
    %v305 = vunpack.c.h.b16 %v180
    %v306 = vunpack.c.l.b16 %v181
    %v307 = vunpack.c.h.b16 %v181
    %v308 = vunpack.c.l.b16 %v182
    %v309 = vunpack.c.h.b16 %v182
    %v310 = vunpack.c.l.b16 %v183
    %v311 = vunpack.c.h.b16 %v183
    %v312 = vunpack.c.l.b16 %v184
    %v313 = vunpack.c.h.b16 %v184
    %v314 = vunpack.c.l.b16 %v185
    %v315 = vunpack.c.h.b16 %v185
    %v316 = vunpack.c.l.b16 %v186
    %v317 = vunpack.c.h.b16 %v186
    %v318 = vunpack.c.l.b16 %v187
    %v319 = vunpack.c.h.b16 %v187
    %v320 = vunpack.c.l.b16 %v188
    %v321 = vunpack.c.h.b16 %v188
    %v322 = vunpack.c.l.b16 %v189
    %v323 = vunpack.c.h.b16 %v189
    %v324 = vunpack.c.l.b16 %v190
    %v325 = vunpack.c.h.b16 %v190
    %v326 = vunpack.c.l.b16 %v191
    %v327 = vunpack.c.h.b16 %v191
    %v328 = vunpack.c.l.b16 %v192
    %v329 = vunpack.c.h.b16 %v192
    %v330 = vunpack.c.l.b16 %v193
    %v331 = vunpack.c.h.b16 %v193
    %v332 = vpack.c.b16 %v272, %v268
    %v333 = vpack.c.b16 %v273, %v269
    %v334 = vpack.c.b16 %v274, %v270
    %v335 = vpack.c.b16 %v275, %v271
    %v336 = vpack.c.b16 %v280, %v276
    %v337 = vpack.c.b16 %v281, %v277
    %v338 = vpack.c.b16 %v282, %v278
    %v339 = vpack.c.b16 %v283, %v279
    %v340 = vpack.c.b16 %v288, %v284
    %v341 = vpack.c.b16 %v289, %v285
    %v342 = vpack.c.b16 %v290, %v286
    %v343 = vpack.c.b16 %v291, %v287
    %v344 = vpack.c.b16 %v296, %v292
    %v345 = vpack.c.b16 %v297, %v293
    %v346 = vpack.c.b16 %v298, %v294
    %v347 = vpack.c.b16 %v299, %v295
    %v348 = vpack.c.b16 %v304, %v300
    %v349 = vpack.c.b16 %v305, %v301
    %v350 = vpack.c.b16 %v306, %v302
    %v351 = vpack.c.b16 %v307, %v303
    %v352 = vpack.c.b16 %v312, %v308
    %v353 = vpack.c.b16 %v313, %v309
    %v354 = vpack.c.b16 %v314, %v310
    %v355 = vpack.c.b16 %v315, %v311
    %v356 = vpack.c.b16 %v320, %v316
    %v357 = vpack.c.b16 %v321, %v317
    %v358 = vpack.c.b16 %v322, %v318
    %v359 = vpack.c.b16 %v323, %v319
    %v360 = vpack.c.b16 %v328, %v324
    %v361 = vpack.c.b16 %v329, %v325
    %v362 = vpack.c.b16 %v330, %v326
    %v363 = vpack.c.b16 %v331, %v327
    %396 = vmatpush.bf16.msra.mxu0 %v360
    %397 = vmatpush.bf16.msra.mxu0 %v356
    %398 = vmatpush.bf16.msra.mxu0 %v352
    %399 = vmatpush.bf16.msra.mxu0 %v348
    %400 = vmatpush.bf16.msra.mxu0 %v344
    %401 = vmatpush.bf16.msra.mxu0 %v340
    %402 = vmatpush.bf16.msra.mxu0 %v336
    %403 = vmatpush.bf16.msra.mxu0 %v332
    %404 = vmatmul.bf16.gmra.mxu0 %v234
    %v405 = vpop.f32.mrf.mxu0
    %v406 = vadd.f32 %v196, %v405
    %v407 = vpop.f32.mrf.mxu0
    %408 = vdwg.mxu0
    %409 = vmatpush.bf16.msra.mxu0 %v361
    %410 = vmatpush.bf16.msra.mxu0 %v357
    %411 = vmatpush.bf16.msra.mxu0 %v353
    %412 = vmatpush.bf16.msra.mxu0 %v349
    %413 = vmatpush.bf16.msra.mxu0 %v345
    %414 = vmatpush.bf16.msra.mxu0 %v341
    %415 = vmatpush.bf16.msra.mxu0 %v337
    %416 = vmatpush.bf16.msra.mxu0 %v333
    %417 = vmatmul.bf16.gmra.mxu0 %v234
    %v418 = vpop.f32.mrf.mxu0
    %v419 = vadd.f32 %v197, %v418
    %v420 = vpop.f32.mrf.mxu0
    %421 = vdwg.mxu0
    %422 = vmatpush.bf16.msra.mxu0 %v362
    %423 = vmatpush.bf16.msra.mxu0 %v358
    %424 = vmatpush.bf16.msra.mxu0 %v354
    %425 = vmatpush.bf16.msra.mxu0 %v350
    %426 = vmatpush.bf16.msra.mxu0 %v346
    %427 = vmatpush.bf16.msra.mxu0 %v342
    %428 = vmatpush.bf16.msra.mxu0 %v338
    %429 = vmatpush.bf16.msra.mxu0 %v334
    %430 = vmatmul.bf16.gmra.mxu0 %v234
    %v431 = vpop.f32.mrf.mxu0
    %v432 = vadd.f32 %v198, %v431
    %v433 = vpop.f32.mrf.mxu0
    %434 = vdwg.mxu0
    %435 = vmatpush.bf16.msra.mxu0 %v363
    %436 = vmatpush.bf16.msra.mxu0 %v359
    %437 = vmatpush.bf16.msra.mxu0 %v355
    %438 = vmatpush.bf16.msra.mxu0 %v351
    %439 = vmatpush.bf16.msra.mxu0 %v347
    %440 = vmatpush.bf16.msra.mxu0 %v343
    %441 = vmatpush.bf16.msra.mxu0 %v339
    %442 = vmatpush.bf16.msra.mxu0 %v335
    %443 = vmatmul.bf16.gmra.mxu0 %v234
    %v444 = vpop.f32.mrf.mxu0
    %v445 = vadd.f32 %v199, %v444
    %v446 = vpop.f32.mrf.mxu0
    %447 = vdwg.mxu0
    %v448 = vmax.f32 %v406, 0.0
    %v449 = vmax.f32 %v419, 0.0
    %v450 = vmax.f32 %v432, 0.0
    %v451 = vmax.f32 %v445, 0.0
    %v452 = vpack.c.bf16 %v448, %v448
    %v453 = vpack.c.bf16 %v449, %v449
    %v454 = vpack.c.bf16 %v450, %v450
    %v455 = vpack.c.bf16 %v451, %v451
    %v456 = vld [vmem:[#allocation8] sm:$0xf]
    %v457 = vld [vmem:[#allocation8 + $0x4] sm:$0xf]
    %v458 = vld [vmem:[#allocation8 + $0x8] sm:$0xf]
    %v459 = vld [vmem:[#allocation8 + $0xc] sm:$0xf]
    %v460 = vld [vmem:[#allocation8 + $0x10] sm:$0xf]
    %v461 = vld [vmem:[#allocation8 + $0x14] sm:$0xf]
    %v462 = vld [vmem:[#allocation8 + $0x18] sm:$0xf]
    %v463 = vld [vmem:[#allocation8 + $0x1c] sm:$0xf]
    %v464 = vld [vmem:[#allocation8 + $0x20] sm:$0xf]
    %v465 = vld [vmem:[#allocation8 + $0x24] sm:$0xf]
    %v466 = vld [vmem:[#allocation8 + $0x28] sm:$0xf]
    %v467 = vld [vmem:[#allocation8 + $0x2c] sm:$0xf]
    %v468 = vld [vmem:[#allocation8 + $0x30] sm:$0xf]
    %v469 = vld [vmem:[#allocation8 + $0x34] sm:$0xf]
    %v470 = vld [vmem:[#allocation8 + $0x38] sm:$0xf]
    %v471 = vld [vmem:[#allocation8 + $0x3c] sm:$0xf]
    %v472 = vld [vmem:[#allocation8 + $0x40] sm:$0xf]
    %v473 = vld [vmem:[#allocation8 + $0x44] sm:$0xf]
    %v474 = vld [vmem:[#allocation8 + $0x48] sm:$0xf]
    %v475 = vld [vmem:[#allocation8 + $0x4c] sm:$0xf]
    %v476 = vld [vmem:[#allocation8 + $0x50] sm:$0xf]
    %v477 = vld [vmem:[#allocation8 + $0x54] sm:$0xf]
    %v478 = vld [vmem:[#allocation8 + $0x58] sm:$0xf]
    %v479 = vld [vmem:[#allocation8 + $0x5c] sm:$0xf]
    %v480 = vld [vmem:[#allocation8 + $0x60] sm:$0xf]
    %v481 = vld [vmem:[#allocation8 + $0x64] sm:$0xf]
    %v482 = vld [vmem:[#allocation8 + $0x68] sm:$0xf]
    %v483 = vld [vmem:[#allocation8 + $0x6c] sm:$0xf]
    %v484 = vld [vmem:[#allocation8 + $0x70] sm:$0xf]
    %v485 = vld [vmem:[#allocation8 + $0x74] sm:$0xf]
    %v486 = vld [vmem:[#allocation8 + $0x78] sm:$0xf]
    %v487 = vld [vmem:[#allocation8 + $0x7c] sm:$0xf]
    %v488 = vld [vmem:[#allocation8 + $0x80] sm:$0xf]
    %v489 = vld [vmem:[#allocation8 + $0x84] sm:$0xf]
    %v490 = vld [vmem:[#allocation8 + $0x88] sm:$0xf]
    %v491 = vld [vmem:[#allocation8 + $0x8c] sm:$0xf]
    %v492 = vld [vmem:[#allocation8 + $0x90] sm:$0xf]
    %v493 = vld [vmem:[#allocation8 + $0x94] sm:$0xf]
    %v494 = vld [vmem:[#allocation8 + $0x98] sm:$0xf]
    %v495 = vld [vmem:[#allocation8 + $0x9c] sm:$0xf]
    %v496 = vld [vmem:[#allocation8 + $0xa0] sm:$0xf]
    %v497 = vld [vmem:[#allocation8 + $0xa4] sm:$0xf]
    %v498 = vld [vmem:[#allocation8 + $0xa8] sm:$0xf]
    %v499 = vld [vmem:[#allocation8 + $0xac] sm:$0xf]
    %v500 = vld [vmem:[#allocation8 + $0xb0] sm:$0xf]
    %v501 = vld [vmem:[#allocation8 + $0xb4] sm:$0xf]
    %v502 = vld [vmem:[#allocation8 + $0xb8] sm:$0xf]
    %v503 = vld [vmem:[#allocation8 + $0xbc] sm:$0xf]
    %v504 = vld [vmem:[#allocation8 + $0xc0] sm:$0xf]
    %v505 = vld [vmem:[#allocation8 + $0xc4] sm:$0xf]
    %v506 = vld [vmem:[#allocation8 + $0xc8] sm:$0xf]
    %v507 = vld [vmem:[#allocation8 + $0xcc] sm:$0xf]
    %v508 = vld [vmem:[#allocation8 + $0xd0] sm:$0xf]
    %v509 = vld [vmem:[#allocation8 + $0xd4] sm:$0xf]
    %v510 = vld [vmem:[#allocation8 + $0xd8] sm:$0xf]
    %v511 = vld [vmem:[#allocation8 + $0xdc] sm:$0xf]
    %v512 = vld [vmem:[#allocation8 + $0xe0] sm:$0xf]
    %v513 = vld [vmem:[#allocation8 + $0xe4] sm:$0xf]
    %v514 = vld [vmem:[#allocation8 + $0xe8] sm:$0xf]
    %v515 = vld [vmem:[#allocation8 + $0xec] sm:$0xf]
    %v516 = vld [vmem:[#allocation8 + $0xf0] sm:$0xf]
    %v517 = vld [vmem:[#allocation8 + $0xf4] sm:$0xf]
    %v518 = vld [vmem:[#allocation8 + $0xf8] sm:$0xf]
    %v519 = vld [vmem:[#allocation8 + $0xfc] sm:$0xf]
    %v520 = vld [vmem:[%s4] sm:$0x1]
    %v522 = vperm.slane %v520, 0
    %v588 = vunpack.c.l.b16 %v456
    %v589 = vunpack.c.l.b16 %v457
    %v590 = vunpack.c.l.b16 %v458
    %v591 = vunpack.c.l.b16 %v459
    %v592 = vunpack.c.l.b16 %v460
    %v593 = vunpack.c.l.b16 %v461
    %v594 = vunpack.c.l.b16 %v462
    %v595 = vunpack.c.l.b16 %v463
    %v596 = vunpack.c.l.b16 %v464
    %v597 = vunpack.c.l.b16 %v465
    %v598 = vunpack.c.l.b16 %v466
    %v599 = vunpack.c.l.b16 %v467
    %v600 = vunpack.c.l.b16 %v468
    %v601 = vunpack.c.l.b16 %v469
    %v602 = vunpack.c.l.b16 %v470
    %v603 = vunpack.c.l.b16 %v471
    %v604 = vunpack.c.l.b16 %v472
    %v605 = vunpack.c.l.b16 %v473
    %v606 = vunpack.c.l.b16 %v474
    %v607 = vunpack.c.l.b16 %v475
    %v608 = vunpack.c.l.b16 %v476
    %v609 = vunpack.c.l.b16 %v477
    %v610 = vunpack.c.l.b16 %v478
    %v611 = vunpack.c.l.b16 %v479
    %v612 = vunpack.c.l.b16 %v480
    %v613 = vunpack.c.l.b16 %v481
    %v614 = vunpack.c.l.b16 %v482
    %v615 = vunpack.c.l.b16 %v483
    %v616 = vunpack.c.l.b16 %v484
    %v617 = vunpack.c.l.b16 %v485
    %v618 = vunpack.c.l.b16 %v486
    %v619 = vunpack.c.l.b16 %v487
    %v620 = vunpack.c.l.b16 %v488
    %v621 = vunpack.c.l.b16 %v489
    %v622 = vunpack.c.l.b16 %v490
    %v623 = vunpack.c.l.b16 %v491
    %v624 = vunpack.c.l.b16 %v492
    %v625 = vunpack.c.l.b16 %v493
    %v626 = vunpack.c.l.b16 %v494
    %v627 = vunpack.c.l.b16 %v495
    %v628 = vunpack.c.l.b16 %v496
    %v629 = vunpack.c.l.b16 %v497
    %v630 = vunpack.c.l.b16 %v498
    %v631 = vunpack.c.l.b16 %v499
    %v632 = vunpack.c.l.b16 %v500
    %v633 = vunpack.c.l.b16 %v501
    %v634 = vunpack.c.l.b16 %v502
    %v635 = vunpack.c.l.b16 %v503
    %v636 = vunpack.c.l.b16 %v504
    %v637 = vunpack.c.l.b16 %v505
    %v638 = vunpack.c.l.b16 %v506
    %v639 = vunpack.c.l.b16 %v507
    %v640 = vunpack.c.l.b16 %v508
    %v641 = vunpack.c.l.b16 %v509
    %v642 = vunpack.c.l.b16 %v510
    %v643 = vunpack.c.l.b16 %v511
    %v644 = vunpack.c.l.b16 %v512
    %v645 = vunpack.c.l.b16 %v513
    %v646 = vunpack.c.l.b16 %v514
    %v647 = vunpack.c.l.b16 %v515
    %v648 = vunpack.c.l.b16 %v516
    %v649 = vunpack.c.l.b16 %v517
    %v650 = vunpack.c.l.b16 %v518
    %v651 = vunpack.c.l.b16 %v519
    %v652 = vpack.c.b16 %v589, %v588
    %v653 = vpack.c.b16 %v591, %v590
    %v654 = vpack.c.b16 %v593, %v592
    %v655 = vpack.c.b16 %v595, %v594
    %v656 = vpack.c.b16 %v597, %v596
    %v657 = vpack.c.b16 %v599, %v598
    %v658 = vpack.c.b16 %v601, %v600
    %v659 = vpack.c.b16 %v603, %v602
    %v660 = vpack.c.b16 %v605, %v604
    %v661 = vpack.c.b16 %v607, %v606
    %v662 = vpack.c.b16 %v609, %v608
    %v663 = vpack.c.b16 %v611, %v610
    %v664 = vpack.c.b16 %v613, %v612
    %v665 = vpack.c.b16 %v615, %v614
    %v666 = vpack.c.b16 %v617, %v616
    %v667 = vpack.c.b16 %v619, %v618
    %v668 = vpack.c.b16 %v621, %v620
    %v669 = vpack.c.b16 %v623, %v622
    %v670 = vpack.c.b16 %v625, %v624
    %v671 = vpack.c.b16 %v627, %v626
    %v672 = vpack.c.b16 %v629, %v628
    %v673 = vpack.c.b16 %v631, %v630
    %v674 = vpack.c.b16 %v633, %v632
    %v675 = vpack.c.b16 %v635, %v634
    %v676 = vpack.c.b16 %v637, %v636
    %v677 = vpack.c.b16 %v639, %v638
    %v678 = vpack.c.b16 %v641, %v640
    %v679 = vpack.c.b16 %v643, %v642
    %v680 = vpack.c.b16 %v645, %v644
    %v681 = vpack.c.b16 %v647, %v646
    %v682 = vpack.c.b16 %v649, %v648
    %v683 = vpack.c.b16 %v651, %v650
    %716 = vmatpush.bf16.msra.mxu0 %v659
    %717 = vmatpush.bf16.msra.mxu0 %v658
    %718 = vmatpush.bf16.msra.mxu0 %v657
    %719 = vmatpush.bf16.msra.mxu0 %v656
    %720 = vmatpush.bf16.msra.mxu0 %v655
    %721 = vmatpush.bf16.msra.mxu0 %v654
    %722 = vmatpush.bf16.msra.mxu0 %v653
    %723 = vmatpush.bf16.msra.mxu0 %v652
    %724 = vmatmul.bf16.gmra.mxu0 %v452
    %v725 = vpop.f32.mrf.mxu0
    %v726 = vadd.f32 %v522, %v725
    %v727 = vpop.f32.mrf.mxu0
    %728 = vdwg.mxu0
    %729 = vmatpush.bf16.msra.mxu0 %v667
    %730 = vmatpush.bf16.msra.mxu0 %v666
    %731 = vmatpush.bf16.msra.mxu0 %v665
    %732 = vmatpush.bf16.msra.mxu0 %v664
    %733 = vmatpush.bf16.msra.mxu0 %v663
    %734 = vmatpush.bf16.msra.mxu0 %v662
    %735 = vmatpush.bf16.msra.mxu0 %v661
    %736 = vmatpush.bf16.msra.mxu0 %v660
    %737 = vmatmul.bf16.gmra.mxu0 %v453
    %v738 = vpop.f32.mrf.mxu0
    %v739 = vadd.f32 %v726, %v738
    %v740 = vpop.f32.mrf.mxu0
    %741 = vdwg.mxu0
    %742 = vmatpush.bf16.msra.mxu0 %v675
    %743 = vmatpush.bf16.msra.mxu0 %v674
    %744 = vmatpush.bf16.msra.mxu0 %v673
    %745 = vmatpush.bf16.msra.mxu0 %v672
    %746 = vmatpush.bf16.msra.mxu0 %v671
    %747 = vmatpush.bf16.msra.mxu0 %v670
    %748 = vmatpush.bf16.msra.mxu0 %v669
    %749 = vmatpush.bf16.msra.mxu0 %v668
    %750 = vmatmul.bf16.gmra.mxu0 %v454
    %v751 = vpop.f32.mrf.mxu0
    %v752 = vadd.f32 %v739, %v751
    %v753 = vpop.f32.mrf.mxu0
    %754 = vdwg.mxu0
    %755 = vmatpush.bf16.msra.mxu0 %v683
    %756 = vmatpush.bf16.msra.mxu0 %v682
    %757 = vmatpush.bf16.msra.mxu0 %v681
    %758 = vmatpush.bf16.msra.mxu0 %v680
    %759 = vmatpush.bf16.msra.mxu0 %v679
    %760 = vmatpush.bf16.msra.mxu0 %v678
    %761 = vmatpush.bf16.msra.mxu0 %v677
    %762 = vmatpush.bf16.msra.mxu0 %v676
    %763 = vmatmul.bf16.gmra.mxu0 %v455
    %v764 = vpop.f32.mrf.mxu0
    %v765 = vadd.f32 %v752, %v764
    %v766 = vpop.f32.mrf.mxu0
    %767 = vdwg.mxu0
    %768 = vst [vmem:[#allocation10] sm:$0xff] %v765
    // Predicated region
    $region38: #{tpu_custom_call.1} parent=1 // pred_check
      _
    $region39: #{tpu_custom_call.1} parent=1 // pred_check_branch
      %770 = sbr.rel (0) target = $region41
    $region40: #{tpu_custom_call.1} parent=1 // pred_region
      %772 = vsyncadd [#allocation4], 0
      %s774 = sshll.u32 [#allocation10], 4
      %s775 = int_to_ptr.vmem [resolvable:$true] %s774
      %s776 = sshll.u32 %s5, 4
      %s777 = int_to_ptr.hbm [resolvable:$true] %s776
      %779 = dma.vmem_to_hbm [thread:$0]  %s775, 128, %s777, [#allocation4]
    $region41: #{tpu_custom_call.1} parent=1 // pred_fallthru
      _
    // Predicated region
    $region42: #{tpu_custom_call.1} parent=1 // pred_check
      _
    $region43: #{tpu_custom_call.1} parent=1 // pred_check_branch
      %781 = sbr.rel (0) target = $region45
    $region44: #{tpu_custom_call.1} parent=1 // pred_region
      %783 = dma.done [#allocation4], 128
    $region45: #{tpu_custom_call.1} parent=1 // pred_fallthru
      _
    %784 = vsyncpa [#allocation3], 1
    %785 = vsyncpa [#allocation6], 1
    %786 = vsyncpa [#allocation9], 1
    %787 = vsyncpa [#allocation4], 1

</llo_original>
